<compile_context>
chip_gen: v7x
topology: tpu7x:2x2x1
jax: 0.10.0
libtpu: 0.0.40
codegen_flags: <defaults>
</compile_context>

<pallas_src>
import functools
import math

import jax
import jax.numpy as jnp
from jax.experimental import pallas as pl
from jax.experimental.pallas import tpu as pltpu


_VMEM_LIMIT_BYTES = 48 * 1024 * 1024   # v7x-safe ceiling (64 MiB physical)


# ----------------------------- helpers --------------------------------------


def _pick_tile(dim, preferred, max_full=2048):
    """Largest preferred tile that evenly divides `dim`, else the full dim
    (only if small enough to be a sane single block)."""
    for t in preferred:
        if dim % t == 0:
            return t
    if dim <= max_full:
        return dim
    # TODO(synk): pad-and-mask tiling path for large dims not divisible by the
    # preferred tile sizes.
    raise NotImplementedError(f"dim {dim} needs a pad-and-mask tiling path")


def _heads_per_group(num_heads, head_dim, max_lanes=512):
    """Widest head group that divides num_heads, is 128-lane aligned and at
    most `max_lanes` wide.  Falls back to all heads (host-side QKV split)."""
    best = None
    for g in range(1, num_heads + 1):
        if num_heads % g:
            continue
        if (g * head_dim) % 128 == 0 and g * head_dim <= max_lanes:
            best = g
    if best is not None:
        return best
    for g in range(num_heads, 0, -1):
        if num_heads % g == 0 and (g * head_dim) % 128 == 0:
            return g
    return num_heads


_SQRT2_INV = 0.7071067811865476


def _erf_approx(x):
    # Abramowitz & Stegun 7.1.26 (|err| <= 1.5e-7): only exp/mul/add/div,
    # all of which lower cleanly in Mosaic.  Matches exact-erf GELU to well
    # below bf16 resolution.
    a1, a2, a3, a4, a5 = 0.254829592, -0.284496736, 1.421413741, -1.453152027, 1.061405429
    p = 0.3275911
    ax = jnp.abs(x)
    t = 1.0 / (1.0 + p * ax)
    poly = ((((a5 * t + a4) * t + a3) * t + a2) * t + a1) * t
    y = 1.0 - poly * jnp.exp(-ax * ax)
    return jnp.where(x < 0, -y, y)


def _gelu_exact(x):
    # torch.nn.functional.gelu default (exact erf form).
    return 0.5 * x * (1.0 + _erf_approx(x * _SQRT2_INV))


# ----------------------------- Pallas kernels -------------------------------


def _dense_kernel(x_ref, w_ref, b_ref, o_ref, *, activation):
    # Weights are VMEM-resident (full K x N block, constant index_map);
    # grid is only over M, so no reduction axis / accumulator scratch needed.
    out = jnp.dot(x_ref[...], w_ref[...], preferred_element_type=jnp.float32)
    out = out + b_ref[...].astype(jnp.float32)
    if activation == "gelu":
        out = _gelu_exact(out)
    o_ref[...] = out.astype(o_ref.dtype)


def _dense_add_ln_kernel(x_ref, w_ref, b_ref, res_ref, g_ref, be_ref, o_ref, *, eps):
    # dense + bias + residual add + LayerNorm, all in one pass over the tile.
    # TODO(synk): hidden-state dropout (p=0.1) is identity (inference).
    y = jnp.dot(x_ref[...], w_ref[...], preferred_element_type=jnp.float32)
    y = y + b_ref[...].astype(jnp.float32) + res_ref[...].astype(jnp.float32)
    mu = jnp.mean(y, axis=-1, keepdims=True)
    yc = y - mu
    var = jnp.mean(yc * yc, axis=-1, keepdims=True)
    inv = jax.lax.rsqrt(var + eps)
    out = yc * inv * g_ref[...].astype(jnp.float32) + be_ref[...].astype(jnp.float32)
    o_ref[...] = out.astype(o_ref.dtype)


def _flash_attention_kernel(*refs, heads, head_dim, mask_kind):
    # grid = (batch, head_group, kv_tile); kv_tile is the innermost reduction
    # axis (online softmax carried in VMEM scratch).  Blocks:
    #   q : (1, S,   hgd)    -- constant over kv (not re-fetched)
    #   k : (1, tkv, hgd)
    #   v : (1, tkv, hgd)
    #   mask ("key") : (1, 1, tkv) ; mask ("full") : (1, S, tkv)
    #   o : (1, S,   hgd)
    if mask_kind == "none":
        q_ref, k_ref, v_ref, o_ref, m_ref, l_ref, acc_ref = refs
        mask_blk = None
    else:
        q_ref, k_ref, v_ref, mask_ref, o_ref, m_ref, l_ref, acc_ref = refs
        mask_blk = mask_ref[0].astype(jnp.float32)   # (1,tkv) or (S,tkv)

    kv = pl.program_id(2)

    @pl.when(kv == 0)
    def _():
        m_ref[...] = jnp.full_like(m_ref, -jnp.inf)
        l_ref[...] = jnp.zeros_like(l_ref)
        acc_ref[...] = jnp.zeros_like(acc_ref)

    q = q_ref[0]     # (S, hgd); 1/sqrt(D) is already folded into the Q weights
    k = k_ref[0]     # (tkv, hgd)
    v = v_ref[0]     # (tkv, hgd)

    for h in range(heads):          # static unroll over heads in this group
        lo = h * head_dim
        qh = jax.lax.slice_in_dim(q, lo, lo + head_dim, axis=1)
        kh = jax.lax.slice_in_dim(k, lo, lo + head_dim, axis=1)
        vh = jax.lax.slice_in_dim(v, lo, lo + head_dim, axis=1)

        # scores = q @ k^T without an explicit transpose: contract on D.
        s = jax.lax.dot_general(
            qh, kh, (((1,), (1,)), ((), ())),
            preferred_element_type=jnp.float32,
        )                                                   # (S, tkv) f32
        if mask_blk is not None:
            s = s + mask_blk

        m_prev = m_ref[h]                                   # (S, 1)
        m_cur = jnp.maximum(m_prev, jnp.max(s, axis=-1, keepdims=True))
        alpha = jnp.exp(m_prev - m_cur)
        p = jnp.exp(s - m_cur)
        l_ref[h] = alpha * l_ref[h] + jnp.sum(p, axis=-1, keepdims=True)
        # TODO(synk): attention-prob dropout (p=0.1) is identity (inference).
        acc_ref[h] = alpha * acc_ref[h] + jnp.dot(
            p.astype(vh.dtype), vh, preferred_element_type=jnp.float32)
        m_ref[h] = m_cur

    @pl.when(kv == pl.num_programs(2) - 1)
    def _():
        parts = []
        for h in range(heads):
            inv = pl.reciprocal(l_ref[h], approx=True)
            parts.append((acc_ref[h] * inv).astype(o_ref.dtype))
        # One lane-dense, full-width store of the whole head group.
        o_ref[0] = parts[0] if heads == 1 else jnp.concatenate(parts, axis=-1)


# ------------------------------ host wrappers --------------------------------


def pallas_dense(x, w, b, *, activation=None, out_dtype=None):
    """x: [M, K] (bf16), w: [K, N] (bf16, VMEM-resident), b: [N] (f32)."""
    M, K = x.shape
    K2, N = w.shape
    assert K == K2
    out_dtype = out_dtype if out_dtype is not None else x.dtype
    # TODO(synk): if the weight does not fit VMEM (>~24 MiB), a K-tiled
    # pipelined variant with an f32 accumulator would be needed; BERT weights
    # are at most ~5 MiB in bf16 so the resident path always applies here.
    tm = _pick_tile(M, (512, 256, 128))

    cost = pl.CostEstimate(
        flops=2 * M * N * K,
        transcendentals=M * N if activation == "gelu" else 0,
        bytes_accessed=(M * K + K * N) * jnp.dtype(x.dtype).itemsize
        + M * N * jnp.dtype(out_dtype).itemsize,
    )

    return pl.pallas_call(
        functools.partial(_dense_kernel, activation=activation),
        out_shape=jax.ShapeDtypeStruct((M, N), out_dtype),
        grid=(M // tm,),
        in_specs=[
            pl.BlockSpec((tm, K), lambda i: (i, 0)),
            pl.BlockSpec((K, N), lambda i: (0, 0)),     # weight stays resident
            pl.BlockSpec((1, N), lambda i: (0, 0)),
        ],
        out_specs=pl.BlockSpec((tm, N), lambda i: (i, 0)),
        compiler_params=pltpu.CompilerParams(
            dimension_semantics=("parallel",),
            vmem_limit_bytes=_VMEM_LIMIT_BYTES,
        ),
        cost_estimate=cost,
    )(x, w, b.reshape(1, N))


def pallas_dense_add_layernorm(x, w, b, residual, gamma, beta, *, eps, out_dtype=None):
    """LayerNorm(x @ w + b + residual); x: [M,K], w: [K,H], residual: [M,H]."""
    M, K = x.shape
    K2, N = w.shape
    assert K == K2 and residual.shape == (M, N)
    out_dtype = out_dtype if out_dtype is not None else x.dtype
    tm = _pick_tile(M, (512, 256, 128))

    cost = pl.CostEstimate(
        flops=2 * M * N * K + 8 * M * N,
        transcendentals=M,
        bytes_accessed=(M * K + K * N + M * N) * jnp.dtype(x.dtype).itemsize
        + M * N * jnp.dtype(out_dtype).itemsize,
    )

    return pl.pallas_call(
        functools.partial(_dense_add_ln_kernel, eps=eps),
        out_shape=jax.ShapeDtypeStruct((M, N), out_dtype),
        grid=(M // tm,),
        in_specs=[
            pl.BlockSpec((tm, K), lambda i: (i, 0)),
            pl.BlockSpec((K, N), lambda i: (0, 0)),     # weight stays resident
            pl.BlockSpec((1, N), lambda i: (0, 0)),
            pl.BlockSpec((tm, N), lambda i: (i, 0)),    # residual
            pl.BlockSpec((1, N), lambda i: (0, 0)),     # gamma
            pl.BlockSpec((1, N), lambda i: (0, 0)),     # beta
        ],
        out_specs=pl.BlockSpec((tm, N), lambda i: (i, 0)),
        compiler_params=pltpu.CompilerParams(
            dimension_semantics=("parallel",),
            vmem_limit_bytes=_VMEM_LIMIT_BYTES,
        ),
        cost_estimate=cost,
    )(x, w, b.reshape(1, N), residual, gamma.reshape(1, N), beta.reshape(1, N))


def pallas_attention(qkv, mask_kind, mask, *, num_heads, head_dim, out_dtype):
    """qkv: [B, S, 3H] fused projection -> context [B, S, H] (flash-style)."""
    B, S, three_h = qkv.shape
    H = num_heads * head_dim
    assert three_h == 3 * H

    hg = _heads_per_group(num_heads, head_dim)   # heads per grid step
    hgd = hg * head_dim                          # lane width of one block
    n_hg = num_heads // hg
    tkv = _pick_tile(S, (512, 256, 128))
    n_kv = S // tkv

    kernel = functools.partial(
        _flash_attention_kernel, heads=hg, head_dim=head_dim, mask_kind=mask_kind)

    if hgd % 128 == 0:
        # Fused path: pass the same [B,S,3H] tensor three times; each BlockSpec
        # pulls its Q / K / V column block directly (no host split/transpose).
        q_in = k_in = v_in = qkv
        q_spec = pl.BlockSpec((1, S, hgd), lambda b, g, kv: (b, 0, g))
        k_spec = pl.BlockSpec((1, tkv, hgd), lambda b, g, kv: (b, kv, n_hg + g))
        v_spec = pl.BlockSpec((1, tkv, hgd), lambda b, g, kv: (b, kv, 2 * n_hg + g))
    else:
        # Fallback for non-lane-aligned head widths: host-side split, full-H
        # blocks (hgd == H in this case).
        q_in = jax.lax.slice_in_dim(qkv, 0, H, axis=2)
        k_in = jax.lax.slice_in_dim(qkv, H, 2 * H, axis=2)
        v_in = jax.lax.slice_in_dim(qkv, 2 * H, 3 * H, axis=2)
        q_spec = pl.BlockSpec((1, S, hgd), lambda b, g, kv: (b, 0, g))
        k_spec = pl.BlockSpec((1, tkv, hgd), lambda b, g, kv: (b, kv, g))
        v_spec = pl.BlockSpec((1, tkv, hgd), lambda b, g, kv: (b, kv, g))

    in_specs = [q_spec, k_spec, v_spec]
    args = [q_in, k_in, v_in]
    mask_bytes = 0
    if mask_kind == "key":
        # Compact additive key mask [B, 1, S]: tiny block, broadcast in-kernel.
        in_specs.append(pl.BlockSpec((1, 1, tkv), lambda b, g, kv: (b, 0, kv)))
        args.append(mask)
        mask_bytes = B * S * 4
    elif mask_kind == "full":
        # General per-query additive mask [B, S, S], streamed along KV tiles.
        in_specs.append(pl.BlockSpec((1, S, tkv), lambda b, g, kv: (b, 0, kv)))
        args.append(mask)
        mask_bytes = B * S * S * 4

    itemsize = jnp.dtype(qkv.dtype).itemsize
    cost = pl.CostEstimate(
        flops=4 * B * num_heads * S * S * head_dim,
        transcendentals=B * num_heads * S * S,
        bytes_accessed=4 * B * S * H * itemsize + mask_bytes,
    )

    return pl.pallas_call(
        kernel,
        out_shape=jax.ShapeDtypeStruct((B, S, H), out_dtype),
        grid=(B, n_hg, n_kv),
        in_specs=in_specs,
        out_specs=pl.BlockSpec((1, S, hgd), lambda b, g, kv: (b, 0, g)),
        scratch_shapes=[
            pltpu.VMEM((hg, S, 1), jnp.float32),          # running max m
            pltpu.VMEM((hg, S, 1), jnp.float32),          # running denom l
            pltpu.VMEM((hg, S, head_dim), jnp.float32),   # context accumulator
        ],
        compiler_params=pltpu.CompilerParams(
            dimension_semantics=("parallel", "parallel", "arbitrary"),
            vmem_limit_bytes=_VMEM_LIMIT_BYTES,
        ),
        cost_estimate=cost,
    )(*args)


def _prep_mask(attention_mask, B, S):
    """Canonicalize the additive attention mask (numpy-broadcast semantics
    against [B, nH, S, S] scores, like the PyTorch reference).

    Returns (kind, array):
      "none": no mask; "key": [B,1,S] key mask; "full": [B,S,S] mask.
    """
    if attention_mask is None:
        return "none", None
    m = jnp.asarray(attention_mask, jnp.float32)
    while m.ndim < 4:
        m = m[None]
    if m.ndim != 4:
        raise ValueError("attention_mask must be broadcastable to [B, 1, S, S]")
    if m.shape[1] != 1:
        # TODO(synk): per-head additive attention masks are not supported.
        raise NotImplementedError("per-head attention masks are not supported")
    if m.shape[2] == 1:
        key = jnp.broadcast_to(m, (B, 1, 1, S)).reshape(B, 1, S)
        return "key", key
    full = jnp.broadcast_to(m, (B, 1, S, S)).reshape(B, S, S)
    return "full", full


# ------------------------------ full module ----------------------------------


class BertEncoderPallas:
    """BertEncoder forward (note: the PyTorch reference reuses ONE BertLayer
    instance for all `num_hidden_layers` layers, i.e. shared weights)."""

    def __init__(self, hidden_size, num_attention_heads, intermediate_size,
                 num_hidden_layers, key, dtype=jnp.bfloat16, eps=1e-12):
        if hidden_size % num_attention_heads != 0:
            raise ValueError(
                "The hidden size (%d) is not a multiple of the number of "
                "attention heads (%d)" % (hidden_size, num_attention_heads)
            )
        self.hidden_size = hidden_size
        self.num_attention_heads = num_attention_heads
        self.attention_head_size = hidden_size // num_attention_heads
        self.intermediate_size = intermediate_size
        self.num_hidden_layers = num_hidden_layers
        self.dtype = dtype
        self.eps = eps

        keys = jax.random.split(key, 12)

        def linear_init(kw, kb, fan_in, fan_out):
            bound = 1.0 / math.sqrt(fan_in)
            w = jax.random.uniform(kw, (fan_in, fan_out), jnp.float32, -bound, bound)
            b = jax.random.uniform(kb, (fan_out,), jnp.float32, -bound, bound)
            return w, b

        wq, bq = linear_init(keys[0], keys[1], hidden_size, hidden_size)
        wk, bk = linear_init(keys[2], keys[3], hidden_size, hidden_size)
        wv, bv = linear_init(keys[4], keys[5], hidden_size, hidden_size)
        # Fused QKV projection with the 1/sqrt(D) attention scale folded into
        # the Q columns (one-time, exactly equivalent, removes a VPU pass and
        # one bf16 rounding per attention block).
        scale = 1.0 / math.sqrt(self.attention_head_size)
        self.w_qkv = jnp.concatenate([wq * scale, wk, wv], axis=1).astype(dtype)
        self.b_qkv = jnp.concatenate([bq * scale, bk, bv])                 # f32 [3H]

        w, b = linear_init(keys[6], keys[7], hidden_size, hidden_size)
        self.w_attn_out, self.b_attn_out = w.astype(dtype), b
        w, b = linear_init(keys[8], keys[9], hidden_size, intermediate_size)
        self.w_inter, self.b_inter = w.astype(dtype), b
        w, b = linear_init(keys[10], keys[11], intermediate_size, hidden_size)
        self.w_out, self.b_out = w.astype(dtype), b

        self.ln1_g = jnp.ones((hidden_size,), jnp.float32)
        self.ln1_b = jnp.zeros((hidden_size,), jnp.float32)
        self.ln2_g = jnp.ones((hidden_size,), jnp.float32)
        self.ln2_b = jnp.zeros((hidden_size,), jnp.float32)

        # One XLA program for the whole forward: all pallas_calls per layer are
        # scheduled together (no per-kernel host dispatch latency).
        self._jit_forward = jax.jit(self._forward)

    def _layer(self, x2d, B, S, mask_kind, mask):
        H = self.hidden_size

        # --- BertSelfAttention (fused QKV dense + flash attention) ---
        qkv = pallas_dense(x2d, self.w_qkv, self.b_qkv, out_dtype=self.dtype)
        ctx = pallas_attention(
            qkv.reshape(B, S, 3 * H), mask_kind, mask,
            num_heads=self.num_attention_heads,
            head_dim=self.attention_head_size,
            out_dtype=self.dtype,
        )                                                    # [B, S, H]

        # --- BertSelfOutput (dense + dropout(identity) + add&LN fused) ---
        attn = pallas_dense_add_layernorm(
            ctx.reshape(B * S, H), self.w_attn_out, self.b_attn_out,
            x2d, self.ln1_g, self.ln1_b, eps=self.eps, out_dtype=self.dtype)

        # --- BertIntermediate (dense + exact GELU fused) ---
        inter = pallas_dense(attn, self.w_inter, self.b_inter,
                             activation="gelu", out_dtype=self.dtype)

        # --- BertOutput (dense + dropout(identity) + add&LN fused) ---
        out = pallas_dense_add_layernorm(
            inter, self.w_out, self.b_out,
            attn, self.ln2_g, self.ln2_b, eps=self.eps, out_dtype=self.dtype)
        return out

    def _forward(self, hidden_states, attention_mask):
        B, S, H = hidden_states.shape
        mask_kind, mask = _prep_mask(attention_mask, B, S)
        x = hidden_states.astype(self.dtype).reshape(B * S, H)
        for _ in range(self.num_hidden_layers):      # shared layer weights
            x = self._layer(x, B, S, mask_kind, mask)
        return x.reshape(B, S, H)

    def __call__(self, hidden_states, attention_mask=None):
        return self._jit_forward(hidden_states, attention_mask)


# --------------------------- pure-JAX reference -------------------------------


def _reference(module, hidden_states, attention_mask=None):
    f32 = jnp.float32
    B, S, H = hidden_states.shape
    nH, D, eps = module.num_attention_heads, module.attention_head_size, module.eps
    x = hidden_states.astype(module.dtype).astype(f32)

    # Note: module.w_qkv already has 1/sqrt(D) folded into its Q columns, so
    # the reference does NOT additionally scale the scores.
    w_qkv = module.w_qkv.astype(f32)
    b_qkv = module.b_qkv.astype(f32)
    w_ao = module.w_attn_out.astype(f32)
    w_i = module.w_inter.astype(f32)
    w_o = module.w_out.astype(f32)

    def layernorm(v, g, b):
        mu = jnp.mean(v, axis=-1, keepdims=True)
        var = jnp.mean((v - mu) ** 2, axis=-1, keepdims=True)
        return (v - mu) / jnp.sqrt(var + eps) * g + b

    mask = None
    if attention_mask is not None:
        mask = jnp.broadcast_to(jnp.asarray(attention_mask, f32), (B, 1, S, S))

    for _ in range(module.num_hidden_layers):
        qkv = x @ w_qkv + b_qkv
        q, k, v = jnp.split(qkv, 3, axis=-1)
        q = q.reshape(B, S, nH, D).transpose(0, 2, 1, 3)
        k = k.reshape(B, S, nH, D).transpose(0, 2, 1, 3)
        v = v.reshape(B, S, nH, D).transpose(0, 2, 1, 3)
        scores = jnp.einsum("bhqd,bhkd->bhqk", q, k)
        if mask is not None:
            scores = scores + mask
        probs = jax.nn.softmax(scores, axis=-1)
        ctx = jnp.einsum("bhqk,bhkd->bhqd", probs, v)
        ctx = ctx.transpose(0, 2, 1, 3).reshape(B, S, H)
        attn = layernorm(ctx @ w_ao + module.b_attn_out + x, module.ln1_g, module.ln1_b)
        inter = jax.nn.gelu(attn @ w_i + module.b_inter, approximate=False)
        x = layernorm(inter @ w_o + module.b_out + attn, module.ln2_g, module.ln2_b)
    return x


if __name__ == "__main__":
    # Small shapes consistent with the module: hidden divisible by heads,
    # head_dim = 64 (BERT-like) so head groups are 128-lane dense.
    B, S, H, NH, I, L = 2, 8, 128, 2, 256, 2

    key = jax.random.PRNGKey(0)
    k_param, k_x = jax.random.split(key)

    module = BertEncoderPallas(H, NH, I, L, k_param)
    hidden_states = jax.random.normal(k_x, (B, S, H), jnp.float32)

    # Additive attention mask (0 = keep, -10000 = masked); batch 1 masks the
    # last 3 key positions.  Shape broadcastable to [B, 1, S, S].
    valid = jnp.ones((B, 1, 1, S), jnp.float32)
    valid = valid.at[1, :, :, S - 3:].set(0.0)
    attention_mask = (1.0 - valid) * -10000.0

    out = jax.block_until_ready(module(hidden_states, attention_mask))
    ref = _reference(module, hidden_states, attention_mask)
    assert out.shape == (B, S, H)
    err = float(jnp.max(jnp.abs(out.astype(jnp.float32) - ref)))
    assert jnp.allclose(out.astype(jnp.float32), ref, atol=5e-2, rtol=5e-2), err

    # Also exercise the mask-free kernel variant (attention_mask=None path).
    out2 = jax.block_until_ready(module(hidden_states, None))
    ref2 = _reference(module, hidden_states, None)
    err2 = float(jnp.max(jnp.abs(out2.astype(jnp.float32) - ref2)))
    assert jnp.allclose(out2.astype(jnp.float32), ref2, atol=5e-2, rtol=5e-2), err2

    print("KERNEL_OK")
</pallas_src>

<mosaic_0001>
module attributes {stable_mosaic.version = 11 : i64} {
  func.func @_flash_attention_kernel(%arg0: i32, %arg1: i32, %arg2: i32, %arg3: memref<1x8x128xbf16, #tpu.memory_space<vmem>>, %arg4: memref<1x8x128xbf16, #tpu.memory_space<vmem>>, %arg5: memref<1x8x128xbf16, #tpu.memory_space<vmem>>, %arg6: memref<1x1x8xf32, #tpu.memory_space<vmem>>, %arg7: memref<1x8x128xbf16, #tpu.memory_space<vmem>>, %arg8: memref<2x8x1xf32, #tpu.memory_space<vmem>>, %arg9: memref<2x8x1xf32, #tpu.memory_space<vmem>>, %arg10: memref<2x8x64xf32, #tpu.memory_space<vmem>>) attributes {dimension_semantics = [#tpu.dimension_semantics<parallel>, #tpu.dimension_semantics<parallel>, #tpu.dimension_semantics<arbitrary>], iteration_bounds = array<i64: 2, 1, 1>, scalar_prefetch = 0 : i64, scratch_operands = 3 : i64, tpu.core_type = #tpu.core_type<tc>, window_params = [{transform_indices = @transform_0, window_bounds = array<i64: 1, 8, 128>}, {transform_indices = @transform_1, window_bounds = array<i64: 1, 8, 128>}, {transform_indices = @transform_2, window_bounds = array<i64: 1, 8, 128>}, {transform_indices = @transform_3, window_bounds = array<i64: 1, 1, 8>}, {transform_indices = @transform_4, window_bounds = array<i64: 1, 8, 128>}]} {
    %c0 = arith.constant 0 : index
    %c0_0 = arith.constant 0 : index
    %c0_1 = arith.constant 0 : index
    %0 = vector.load %arg6[%c0, %c0_0, %c0_1] : memref<1x1x8xf32, #tpu.memory_space<vmem>>, vector<1x1x8xf32>
    %1 = vector.shape_cast %0 : vector<1x1x8xf32> to vector<1x8xf32>
    %c0_i32 = arith.constant 0 : i32
    %2 = arith.cmpi eq, %arg2, %c0_i32 : i32
    %3 = arith.extui %2 : i1 to i32
    %c0_i32_2 = arith.constant 0 : i32
    %4 = arith.cmpi ne, %3, %c0_i32_2 : i32
    scf.if %4 {
      %cst_56 = arith.constant 0xFF800000 : f32
      %90 = vector.broadcast %cst_56 : f32 to vector<2x8x1xf32>
      %c0_57 = arith.constant 0 : index
      %c0_58 = arith.constant 0 : index
      %c0_59 = arith.constant 0 : index
      %91 = vector.load %arg8[%c0_57, %c0_58, %c0_59] : memref<2x8x1xf32, #tpu.memory_space<vmem>>, vector<2x8x1xf32>
      tpu.vector_store %arg8[%c0_57, %c0_58, %c0_59], %90 {strides = array<i32>} : memref<2x8x1xf32, #tpu.memory_space<vmem>>, vector<2x8x1xf32>,
      %cst_60 = arith.constant 0.000000e+00 : f32
      %92 = vector.broadcast %cst_60 : f32 to vector<2x8x1xf32>
      %c0_61 = arith.constant 0 : index
      %c0_62 = arith.constant 0 : index
      %c0_63 = arith.constant 0 : index
      %93 = vector.load %arg9[%c0_61, %c0_62, %c0_63] : memref<2x8x1xf32, #tpu.memory_space<vmem>>, vector<2x8x1xf32>
      tpu.vector_store %arg9[%c0_61, %c0_62, %c0_63], %92 {strides = array<i32>} : memref<2x8x1xf32, #tpu.memory_space<vmem>>, vector<2x8x1xf32>,
      %cst_64 = arith.constant 0.000000e+00 : f32
      %94 = vector.broadcast %cst_64 : f32 to vector<2x8x64xf32>
      %c0_65 = arith.constant 0 : index
      %c0_66 = arith.constant 0 : index
      %c0_67 = arith.constant 0 : index
      %95 = vector.load %arg10[%c0_65, %c0_66, %c0_67] : memref<2x8x64xf32, #tpu.memory_space<vmem>>, vector<2x8x64xf32>
      tpu.vector_store %arg10[%c0_65, %c0_66, %c0_67], %94 {strides = array<i32>} : memref<2x8x64xf32, #tpu.memory_space<vmem>>, vector<2x8x64xf32>,
    } else {
    }
    %c0_3 = arith.constant 0 : index
    %c0_4 = arith.constant 0 : index
    %c0_5 = arith.constant 0 : index
    %5 = vector.load %arg3[%c0_3, %c0_4, %c0_5] : memref<1x8x128xbf16, #tpu.memory_space<vmem>>, vector<1x8x128xbf16>
    %6 = vector.shape_cast %5 : vector<1x8x128xbf16> to vector<8x128xbf16>
    %c0_6 = arith.constant 0 : index
    %c0_7 = arith.constant 0 : index
    %c0_8 = arith.constant 0 : index
    %7 = vector.load %arg4[%c0_6, %c0_7, %c0_8] : memref<1x8x128xbf16, #tpu.memory_space<vmem>>, vector<1x8x128xbf16>
    %8 = vector.shape_cast %7 : vector<1x8x128xbf16> to vector<8x128xbf16>
    %c0_9 = arith.constant 0 : index
    %c0_10 = arith.constant 0 : index
    %c0_11 = arith.constant 0 : index
    %9 = vector.load %arg5[%c0_9, %c0_10, %c0_11] : memref<1x8x128xbf16, #tpu.memory_space<vmem>>, vector<1x8x128xbf16>
    %10 = vector.shape_cast %9 : vector<1x8x128xbf16> to vector<8x128xbf16>
    %11 = vector.extract_strided_slice %6 {offsets = [0, 0], sizes = [8, 64], strides = [1, 1]} : vector<8x128xbf16> to vector<8x64xbf16>
    %12 = vector.extract_strided_slice %8 {offsets = [0, 0], sizes = [8, 64], strides = [1, 1]} : vector<8x128xbf16> to vector<8x64xbf16>
    %13 = vector.extract_strided_slice %10 {offsets = [0, 0], sizes = [8, 64], strides = [1, 1]} : vector<8x128xbf16> to vector<8x64xbf16>
    %cst = arith.constant dense<0.000000e+00> : vector<8x8xf32>
    %14 = tpu.matmul %11, %12, %cst {dimension_numbers = #tpu.dot_dimension_numbers<[1], [1], [0], [0], [0, 0, 1, 0], [], []>} : vector<8x64xbf16>, vector<8x64xbf16>, vector<8x8xf32> -> vector<8x8xf32>
    %15 = vector.broadcast %1 : vector<1x8xf32> to vector<8x8xf32>
    %16 = arith.addf %14, %15 : vector<8x8xf32>
    %c0_12 = arith.constant 0 : index
    %c0_13 = arith.constant 0 : index
    %c0_14 = arith.constant 0 : index
    %17 = vector.load %arg8[%c0_12, %c0_13, %c0_14] : memref<2x8x1xf32, #tpu.memory_space<vmem>>, vector<1x8x1xf32>
    %18 = vector.shape_cast %17 : vector<1x8x1xf32> to vector<8x1xf32>
    %cst_15 = arith.constant dense<0xFF800000> : vector<8xf32>
    %19 = vector.multi_reduction <maximumf>, %16, %cst_15 [1] : vector<8x8xf32> to vector<8xf32>
    %20 = vector.shape_cast %19 : vector<8xf32> to vector<8x1xf32>
    %21 = arith.maximumf %18, %20 : vector<8x1xf32>
    %22 = arith.subf %18, %21 : vector<8x1xf32>
    %23 = math.exp %22 : vector<8x1xf32>
    %24 = vector.broadcast %21 : vector<8x1xf32> to vector<8x8xf32>
    %25 = arith.subf %16, %24 : vector<8x8xf32>
    %26 = math.exp %25 : vector<8x8xf32>
    %c0_16 = arith.constant 0 : index
    %c0_17 = arith.constant 0 : index
    %c0_18 = arith.constant 0 : index
    %27 = vector.load %arg9[%c0_16, %c0_17, %c0_18] : memref<2x8x1xf32, #tpu.memory_space<vmem>>, vector<1x8x1xf32>
    %28 = vector.shape_cast %27 : vector<1x8x1xf32> to vector<8x1xf32>
    %29 = arith.mulf %23, %28 : vector<8x1xf32>
    %cst_19 = arith.constant dense<0.000000e+00> : vector<8xf32>
    %30 = vector.multi_reduction <add>, %26, %cst_19 [1] : vector<8x8xf32> to vector<8xf32>
    %31 = vector.shape_cast %30 : vector<8xf32> to vector<8x1xf32>
    %32 = arith.addf %29, %31 : vector<8x1xf32>
    %c0_20 = arith.constant 0 : index
    %c0_21 = arith.constant 0 : index
    %c0_22 = arith.constant 0 : index
    %33 = vector.load %arg9[%c0_20, %c0_21, %c0_22] : memref<2x8x1xf32, #tpu.memory_space<vmem>>, vector<1x8x1xf32>
    %34 = vector.shape_cast %33 : vector<1x8x1xf32> to vector<8x1xf32>
    %35 = vector.shape_cast %32 : vector<8x1xf32> to vector<1x8x1xf32>
    tpu.vector_store %arg9[%c0_20, %c0_21, %c0_22], %35 {strides = array<i32>} : memref<2x8x1xf32, #tpu.memory_space<vmem>>, vector<1x8x1xf32>,
    %c0_23 = arith.constant 0 : index
    %c0_24 = arith.constant 0 : index
    %c0_25 = arith.constant 0 : index
    %36 = vector.load %arg10[%c0_23, %c0_24, %c0_25] : memref<2x8x64xf32, #tpu.memory_space<vmem>>, vector<1x8x64xf32>
    %37 = vector.shape_cast %36 : vector<1x8x64xf32> to vector<8x64xf32>
    %38 = vector.broadcast %23 : vector<8x1xf32> to vector<8x64xf32>
    %39 = arith.mulf %38, %37 : vector<8x64xf32>
    %40 = arith.truncf %26 : vector<8x8xf32> to vector<8x8xbf16>
    %cst_26 = arith.constant dense<0.000000e+00> : vector<8x64xf32>
    %41 = tpu.matmul %40, %13, %cst_26 {dimension_numbers = #tpu.dot_dimension_numbers<[1], [0], [0], [1], [0, 0, 1, 1], [], []>} : vector<8x8xbf16>, vector<8x64xbf16>, vector<8x64xf32> -> vector<8x64xf32>
    %42 = arith.addf %39, %41 : vector<8x64xf32>
    %c0_27 = arith.constant 0 : index
    %c0_28 = arith.constant 0 : index
    %c0_29 = arith.constant 0 : index
    %43 = vector.load %arg10[%c0_27, %c0_28, %c0_29] : memref<2x8x64xf32, #tpu.memory_space<vmem>>, vector<1x8x64xf32>
    %44 = vector.shape_cast %43 : vector<1x8x64xf32> to vector<8x64xf32>
    %45 = vector.shape_cast %42 : vector<8x64xf32> to vector<1x8x64xf32>
    tpu.vector_store %arg10[%c0_27, %c0_28, %c0_29], %45 {strides = array<i32>} : memref<2x8x64xf32, #tpu.memory_space<vmem>>, vector<1x8x64xf32>,
    %c0_30 = arith.constant 0 : index
    %c0_31 = arith.constant 0 : index
    %c0_32 = arith.constant 0 : index
    %46 = vector.load %arg8[%c0_30, %c0_31, %c0_32] : memref<2x8x1xf32, #tpu.memory_space<vmem>>, vector<1x8x1xf32>
    %47 = vector.shape_cast %46 : vector<1x8x1xf32> to vector<8x1xf32>
    %48 = vector.shape_cast %21 : vector<8x1xf32> to vector<1x8x1xf32>
    tpu.vector_store %arg8[%c0_30, %c0_31, %c0_32], %48 {strides = array<i32>} : memref<2x8x1xf32, #tpu.memory_space<vmem>>, vector<1x8x1xf32>,
    %49 = vector.extract_strided_slice %6 {offsets = [0, 64], sizes = [8, 64], strides = [1, 1]} : vector<8x128xbf16> to vector<8x64xbf16>
    %50 = vector.extract_strided_slice %8 {offsets = [0, 64], sizes = [8, 64], strides = [1, 1]} : vector<8x128xbf16> to vector<8x64xbf16>
    %51 = vector.extract_strided_slice %10 {offsets = [0, 64], sizes = [8, 64], strides = [1, 1]} : vector<8x128xbf16> to vector<8x64xbf16>
    %cst_33 = arith.constant dense<0.000000e+00> : vector<8x8xf32>
    %52 = tpu.matmul %49, %50, %cst_33 {dimension_numbers = #tpu.dot_dimension_numbers<[1], [1], [0], [0], [0, 0, 1, 0], [], []>} : vector<8x64xbf16>, vector<8x64xbf16>, vector<8x8xf32> -> vector<8x8xf32>
    %53 = vector.broadcast %1 : vector<1x8xf32> to vector<8x8xf32>
    %54 = arith.addf %52, %53 : vector<8x8xf32>
    %c1 = arith.constant 1 : index
    %c0_34 = arith.constant 0 : index
    %c0_35 = arith.constant 0 : index
    %55 = vector.load %arg8[%c1, %c0_34, %c0_35] : memref<2x8x1xf32, #tpu.memory_space<vmem>>, vector<1x8x1xf32>
    %56 = vector.shape_cast %55 : vector<1x8x1xf32> to vector<8x1xf32>
    %cst_36 = arith.constant dense<0xFF800000> : vector<8xf32>
    %57 = vector.multi_reduction <maximumf>, %54, %cst_36 [1] : vector<8x8xf32> to vector<8xf32>
    %58 = vector.shape_cast %57 : vector<8xf32> to vector<8x1xf32>
    %59 = arith.maximumf %56, %58 : vector<8x1xf32>
    %60 = arith.subf %56, %59 : vector<8x1xf32>
    %61 = math.exp %60 : vector<8x1xf32>
    %62 = vector.broadcast %59 : vector<8x1xf32> to vector<8x8xf32>
    %63 = arith.subf %54, %62 : vector<8x8xf32>
    %64 = math.exp %63 : vector<8x8xf32>
    %c1_37 = arith.constant 1 : index
    %c0_38 = arith.constant 0 : index
    %c0_39 = arith.constant 0 : index
    %65 = vector.load %arg9[%c1_37, %c0_38, %c0_39] : memref<2x8x1xf32, #tpu.memory_space<vmem>>, vector<1x8x1xf32>
    %66 = vector.shape_cast %65 : vector<1x8x1xf32> to vector<8x1xf32>
    %67 = arith.mulf %61, %66 : vector<8x1xf32>
    %cst_40 = arith.constant dense<0.000000e+00> : vector<8xf32>
    %68 = vector.multi_reduction <add>, %64, %cst_40 [1] : vector<8x8xf32> to vector<8xf32>
    %69 = vector.shape_cast %68 : vector<8xf32> to vector<8x1xf32>
    %70 = arith.addf %67, %69 : vector<8x1xf32>
    %c1_41 = arith.constant 1 : index
    %c0_42 = arith.constant 0 : index
    %c0_43 = arith.constant 0 : index
    %71 = vector.load %arg9[%c1_41, %c0_42, %c0_43] : memref<2x8x1xf32, #tpu.memory_space<vmem>>, vector<1x8x1xf32>
    %72 = vector.shape_cast %71 : vector<1x8x1xf32> to vector<8x1xf32>
    %73 = vector.shape_cast %70 : vector<8x1xf32> to vector<1x8x1xf32>
    tpu.vector_store %arg9[%c1_41, %c0_42, %c0_43], %73 {strides = array<i32>} : memref<2x8x1xf32, #tpu.memory_space<vmem>>, vector<1x8x1xf32>,
    %c1_44 = arith.constant 1 : index
    %c0_45 = arith.constant 0 : index
    %c0_46 = arith.constant 0 : index
    %74 = vector.load %arg10[%c1_44, %c0_45, %c0_46] : memref<2x8x64xf32, #tpu.memory_space<vmem>>, vector<1x8x64xf32>
    %75 = vector.shape_cast %74 : vector<1x8x64xf32> to vector<8x64xf32>
    %76 = vector.broadcast %61 : vector<8x1xf32> to vector<8x64xf32>
    %77 = arith.mulf %76, %75 : vector<8x64xf32>
    %78 = arith.truncf %64 : vector<8x8xf32> to vector<8x8xbf16>
    %cst_47 = arith.constant dense<0.000000e+00> : vector<8x64xf32>
    %79 = tpu.matmul %78, %51, %cst_47 {dimension_numbers = #tpu.dot_dimension_numbers<[1], [0], [0], [1], [0, 0, 1, 1], [], []>} : vector<8x8xbf16>, vector<8x64xbf16>, vector<8x64xf32> -> vector<8x64xf32>
    %80 = arith.addf %77, %79 : vector<8x64xf32>
    %c1_48 = arith.constant 1 : index
    %c0_49 = arith.constant 0 : index
    %c0_50 = arith.constant 0 : index
    %81 = vector.load %arg10[%c1_48, %c0_49, %c0_50] : memref<2x8x64xf32, #tpu.memory_space<vmem>>, vector<1x8x64xf32>
    %82 = vector.shape_cast %81 : vector<1x8x64xf32> to vector<8x64xf32>
    %83 = vector.shape_cast %80 : vector<8x64xf32> to vector<1x8x64xf32>
    tpu.vector_store %arg10[%c1_48, %c0_49, %c0_50], %83 {strides = array<i32>} : memref<2x8x64xf32, #tpu.memory_space<vmem>>, vector<1x8x64xf32>,
    %c1_51 = arith.constant 1 : index
    %c0_52 = arith.constant 0 : index
    %c0_53 = arith.constant 0 : index
    %84 = vector.load %arg8[%c1_51, %c0_52, %c0_53] : memref<2x8x1xf32, #tpu.memory_space<vmem>>, vector<1x8x1xf32>
    %85 = vector.shape_cast %84 : vector<1x8x1xf32> to vector<8x1xf32>
    %86 = vector.shape_cast %59 : vector<8x1xf32> to vector<1x8x1xf32>
    tpu.vector_store %arg8[%c1_51, %c0_52, %c0_53], %86 {strides = array<i32>} : memref<2x8x1xf32, #tpu.memory_space<vmem>>, vector<1x8x1xf32>,
    %c0_i32_54 = arith.constant 0 : i32
    %87 = arith.cmpi eq, %arg2, %c0_i32_54 : i32
    %88 = arith.extui %87 : i1 to i32
    %c0_i32_55 = arith.constant 0 : i32
    %89 = arith.cmpi ne, %88, %c0_i32_55 : i32
    scf.if %89 {
      %c0_56 = arith.constant 0 : index
      %c0_57 = arith.constant 0 : index
      %c0_58 = arith.constant 0 : index
      %90 = vector.load %arg9[%c0_56, %c0_57, %c0_58] : memref<2x8x1xf32, #tpu.memory_space<vmem>>, vector<1x8x1xf32>
      %91 = vector.shape_cast %90 : vector<1x8x1xf32> to vector<8x1xf32>
      %92 = tpu.reciprocal %91 {approx = true} : vector<8x1xf32> -> vector<8x1xf32>
      %c0_59 = arith.constant 0 : index
      %c0_60 = arith.constant 0 : index
      %c0_61 = arith.constant 0 : index
      %93 = vector.load %arg10[%c0_59, %c0_60, %c0_61] : memref<2x8x64xf32, #tpu.memory_space<vmem>>, vector<1x8x64xf32>
      %94 = vector.shape_cast %93 : vector<1x8x64xf32> to vector<8x64xf32>
      %95 = vector.broadcast %92 : vector<8x1xf32> to vector<8x64xf32>
      %96 = arith.mulf %94, %95 : vector<8x64xf32>
      %97 = arith.truncf %96 : vector<8x64xf32> to vector<8x64xbf16>
      %c1_62 = arith.constant 1 : index
      %c0_63 = arith.constant 0 : index
      %c0_64 = arith.constant 0 : index
      %98 = vector.load %arg9[%c1_62, %c0_63, %c0_64] : memref<2x8x1xf32, #tpu.memory_space<vmem>>, vector<1x8x1xf32>
      %99 = vector.shape_cast %98 : vector<1x8x1xf32> to vector<8x1xf32>
      %100 = tpu.reciprocal %99 {approx = true} : vector<8x1xf32> -> vector<8x1xf32>
      %c1_65 = arith.constant 1 : index
      %c0_66 = arith.constant 0 : index
      %c0_67 = arith.constant 0 : index
      %101 = vector.load %arg10[%c1_65, %c0_66, %c0_67] : memref<2x8x64xf32, #tpu.memory_space<vmem>>, vector<1x8x64xf32>
      %102 = vector.shape_cast %101 : vector<1x8x64xf32> to vector<8x64xf32>
      %103 = vector.broadcast %100 : vector<8x1xf32> to vector<8x64xf32>
      %104 = arith.mulf %102, %103 : vector<8x64xf32>
      %105 = arith.truncf %104 : vector<8x64xf32> to vector<8x64xbf16>
      %106 = tpu.concatenate %97, %105 in 1 : vector<8x64xbf16>, vector<8x64xbf16> -> vector<8x128xbf16>
      %c0_68 = arith.constant 0 : index
      %c0_69 = arith.constant 0 : index
      %c0_70 = arith.constant 0 : index
      %107 = vector.load %arg7[%c0_68, %c0_69, %c0_70] : memref<1x8x128xbf16, #tpu.memory_space<vmem>>, vector<1x8x128xbf16>
      %108 = vector.shape_cast %107 : vector<1x8x128xbf16> to vector<8x128xbf16>
      %109 = vector.shape_cast %106 : vector<8x128xbf16> to vector<1x8x128xbf16>
      tpu.vector_store %arg7[%c0_68, %c0_69, %c0_70], %109 {strides = array<i32>} : memref<1x8x128xbf16, #tpu.memory_space<vmem>>, vector<1x8x128xbf16>,
    } else {
    }
    return
  }
  func.func @transform_0(%arg0: i32, %arg1: i32, %arg2: i32) -> (i32, i32, i32) {
    %c0_i32 = arith.constant 0 : i32
    %c0_i32_0 = arith.constant 0 : i32
    return %arg0, %c0_i32, %arg1 : i32, i32, i32
  }
  func.func @transform_1(%arg0: i32, %arg1: i32, %arg2: i32) -> (i32, i32, i32) {
    %c1_i32 = arith.constant 1 : i32
    %0 = arith.addi %c1_i32, %arg1 : i32
    %c0_i32 = arith.constant 0 : i32
    return %arg0, %arg2, %0 : i32, i32, i32
  }
  func.func @transform_2(%arg0: i32, %arg1: i32, %arg2: i32) -> (i32, i32, i32) {
    %c2_i32 = arith.constant 2 : i32
    %0 = arith.addi %c2_i32, %arg1 : i32
    %c0_i32 = arith.constant 0 : i32
    return %arg0, %arg2, %0 : i32, i32, i32
  }
  func.func @transform_3(%arg0: i32, %arg1: i32, %arg2: i32) -> (i32, i32, i32) {
    %c0_i32 = arith.constant 0 : i32
    %c0_i32_0 = arith.constant 0 : i32
    return %arg0, %c0_i32, %arg2 : i32, i32, i32
  }
  func.func @transform_4(%arg0: i32, %arg1: i32, %arg2: i32) -> (i32, i32, i32) {
    %c0_i32 = arith.constant 0 : i32
    %c0_i32_0 = arith.constant 0 : i32
    return %arg0, %c0_i32, %arg1 : i32, i32, i32
  }
}

module attributes {stable_mosaic.version = 11 : i64} {
  func.func @_dense_kernel(%arg0: i32, %arg1: memref<16x128xbf16, #tpu.memory_space<vmem>>, %arg2: memref<128x384xbf16, #tpu.memory_space<vmem>>, %arg3: memref<1x384xf32, #tpu.memory_space<vmem>>, %arg4: memref<16x384xbf16, #tpu.memory_space<vmem>>) attributes {dimension_semantics = [#tpu.dimension_semantics<parallel>], iteration_bounds = array<i64: 1>, scalar_prefetch = 0 : i64, scratch_operands = 0 : i64, tpu.core_type = #tpu.core_type<tc>, window_params = [{transform_indices = @transform_0, window_bounds = array<i64: 16, 128>}, {pipeline_mode = #tpu.pipeline_mode<synchronous>, transform_indices = @transform_1, window_bounds = array<i64: 128, 384>}, {pipeline_mode = #tpu.pipeline_mode<synchronous>, transform_indices = @transform_2, window_bounds = array<i64: 1, 384>}, {transform_indices = @transform_3, window_bounds = array<i64: 16, 384>}]} {
    %c0 = arith.constant 0 : index
    %c0_0 = arith.constant 0 : index
    %0 = vector.load %arg1[%c0, %c0_0] : memref<16x128xbf16, #tpu.memory_space<vmem>>, vector<16x128xbf16>
    %c0_1 = arith.constant 0 : index
    %c0_2 = arith.constant 0 : index
    %1 = vector.load %arg2[%c0_1, %c0_2] : memref<128x384xbf16, #tpu.memory_space<vmem>>, vector<128x384xbf16>
    %cst = arith.constant dense<0.000000e+00> : vector<16x384xf32>
    %2 = tpu.matmul %0, %1, %cst {dimension_numbers = #tpu.dot_dimension_numbers<[1], [0], [0], [1], [0, 0, 1, 1], [], []>} : vector<16x128xbf16>, vector<128x384xbf16>, vector<16x384xf32> -> vector<16x384xf32>
    %c0_3 = arith.constant 0 : index
    %c0_4 = arith.constant 0 : index
    %3 = vector.load %arg3[%c0_3, %c0_4] : memref<1x384xf32, #tpu.memory_space<vmem>>, vector<1x384xf32>
    %4 = vector.broadcast %3 : vector<1x384xf32> to vector<16x384xf32>
    %5 = arith.addf %2, %4 : vector<16x384xf32>
    %6 = arith.truncf %5 : vector<16x384xf32> to vector<16x384xbf16>
    %c0_5 = arith.constant 0 : index
    %c0_6 = arith.constant 0 : index
    %7 = vector.load %arg4[%c0_5, %c0_6] : memref<16x384xbf16, #tpu.memory_space<vmem>>, vector<16x384xbf16>
    tpu.vector_store %arg4[%c0_5, %c0_6], %6 {strides = array<i32>} : memref<16x384xbf16, #tpu.memory_space<vmem>>, vector<16x384xbf16>,
    return
  }
  func.func @transform_0(%arg0: i32) -> (i32, i32) {
    %c0_i32 = arith.constant 0 : i32
    %c0_i32_0 = arith.constant 0 : i32
    return %arg0, %c0_i32 : i32, i32
  }
  func.func @transform_1(%arg0: i32) -> (i32, i32) {
    %c0_i32 = arith.constant 0 : i32
    %c0_i32_0 = arith.constant 0 : i32
    %c0_i32_1 = arith.constant 0 : i32
    return %c0_i32, %c0_i32_0 : i32, i32
  }
  func.func @transform_2(%arg0: i32) -> (i32, i32) {
    %c0_i32 = arith.constant 0 : i32
    %c0_i32_0 = arith.constant 0 : i32
    %c0_i32_1 = arith.constant 0 : i32
    return %c0_i32, %c0_i32_0 : i32, i32
  }
  func.func @transform_3(%arg0: i32) -> (i32, i32) {
    %c0_i32 = arith.constant 0 : i32
    %c0_i32_0 = arith.constant 0 : i32
    return %arg0, %c0_i32 : i32, i32
  }
}

module attributes {stable_mosaic.version = 11 : i64} {
  func.func @_dense_add_ln_kernel(%arg0: i32, %arg1: memref<16x128xbf16, #tpu.memory_space<vmem>>, %arg2: memref<128x128xbf16, #tpu.memory_space<vmem>>, %arg3: memref<1x128xf32, #tpu.memory_space<vmem>>, %arg4: memref<16x128xbf16, #tpu.memory_space<vmem>>, %arg5: memref<1x128xf32, #tpu.memory_space<vmem>>, %arg6: memref<1x128xf32, #tpu.memory_space<vmem>>, %arg7: memref<16x128xbf16, #tpu.memory_space<vmem>>) attributes {dimension_semantics = [#tpu.dimension_semantics<parallel>], iteration_bounds = array<i64: 1>, scalar_prefetch = 0 : i64, scratch_operands = 0 : i64, tpu.core_type = #tpu.core_type<tc>, window_params = [{transform_indices = @transform_0, window_bounds = array<i64: 16, 128>}, {pipeline_mode = #tpu.pipeline_mode<synchronous>, transform_indices = @transform_1, window_bounds = array<i64: 128, 128>}, {pipeline_mode = #tpu.pipeline_mode<synchronous>, transform_indices = @transform_2, window_bounds = array<i64: 1, 128>}, {transform_indices = @transform_3, window_bounds = array<i64: 16, 128>}, {pipeline_mode = #tpu.pipeline_mode<synchronous>, transform_indices = @transform_4, window_bounds = array<i64: 1, 128>}, {pipeline_mode = #tpu.pipeline_mode<synchronous>, transform_indices = @transform_5, window_bounds = array<i64: 1, 128>}, {transform_indices = @transform_6, window_bounds = array<i64: 16, 128>}]} {
    %c0 = arith.constant 0 : index
    %c0_0 = arith.constant 0 : index
    %0 = vector.load %arg1[%c0, %c0_0] : memref<16x128xbf16, #tpu.memory_space<vmem>>, vector<16x128xbf16>
    %c0_1 = arith.constant 0 : index
    %c0_2 = arith.constant 0 : index
    %1 = vector.load %arg2[%c0_1, %c0_2] : memref<128x128xbf16, #tpu.memory_space<vmem>>, vector<128x128xbf16>
    %cst = arith.constant dense<0.000000e+00> : vector<16x128xf32>
    %2 = tpu.matmul %0, %1, %cst {dimension_numbers = #tpu.dot_dimension_numbers<[1], [0], [0], [1], [0, 0, 1, 1], [], []>} : vector<16x128xbf16>, vector<128x128xbf16>, vector<16x128xf32> -> vector<16x128xf32>
    %c0_3 = arith.constant 0 : index
    %c0_4 = arith.constant 0 : index
    %3 = vector.load %arg3[%c0_3, %c0_4] : memref<1x128xf32, #tpu.memory_space<vmem>>, vector<1x128xf32>
    %4 = vector.broadcast %3 : vector<1x128xf32> to vector<16x128xf32>
    %5 = arith.addf %2, %4 : vector<16x128xf32>
    %c0_5 = arith.constant 0 : index
    %c0_6 = arith.constant 0 : index
    %6 = vector.load %arg4[%c0_5, %c0_6] : memref<16x128xbf16, #tpu.memory_space<vmem>>, vector<16x128xbf16>
    %7 = arith.extf %6 : vector<16x128xbf16> to vector<16x128xf32>
    %8 = arith.addf %5, %7 : vector<16x128xf32>
    %cst_7 = arith.constant dense<0.000000e+00> : vector<16xf32>
    %9 = vector.multi_reduction <add>, %8, %cst_7 [1] : vector<16x128xf32> to vector<16xf32>
    %10 = vector.shape_cast %9 : vector<16xf32> to vector<16x1xf32>
    %cst_8 = arith.constant 1.280000e+02 : f32
    %11 = vector.broadcast %cst_8 : f32 to vector<16x1xf32>
    %12 = arith.divf %10, %11 : vector<16x1xf32>
    %13 = vector.broadcast %12 : vector<16x1xf32> to vector<16x128xf32>
    %14 = arith.subf %8, %13 : vector<16x128xf32>
    %15 = arith.mulf %14, %14 : vector<16x128xf32>
    %cst_9 = arith.constant dense<0.000000e+00> : vector<16xf32>
    %16 = vector.multi_reduction <add>, %15, %cst_9 [1] : vector<16x128xf32> to vector<16xf32>
    %17 = vector.shape_cast %16 : vector<16xf32> to vector<16x1xf32>
    %cst_10 = arith.constant 1.280000e+02 : f32
    %18 = vector.broadcast %cst_10 : f32 to vector<16x1xf32>
    %19 = arith.divf %17, %18 : vector<16x1xf32>
    %cst_11 = arith.constant 9.99999996E-13 : f32
    %20 = vector.broadcast %cst_11 : f32 to vector<16x1xf32>
    %21 = arith.addf %19, %20 : vector<16x1xf32>
    %22 = math.rsqrt %21 : vector<16x1xf32>
    %23 = vector.broadcast %22 : vector<16x1xf32> to vector<16x128xf32>
    %24 = arith.mulf %14, %23 : vector<16x128xf32>
    %c0_12 = arith.constant 0 : index
    %c0_13 = arith.constant 0 : index
    %25 = vector.load %arg5[%c0_12, %c0_13] : memref<1x128xf32, #tpu.memory_space<vmem>>, vector<1x128xf32>
    %26 = vector.broadcast %25 : vector<1x128xf32> to vector<16x128xf32>
    %27 = arith.mulf %24, %26 : vector<16x128xf32>
    %c0_14 = arith.constant 0 : index
    %c0_15 = arith.constant 0 : index
    %28 = vector.load %arg6[%c0_14, %c0_15] : memref<1x128xf32, #tpu.memory_space<vmem>>, vector<1x128xf32>
    %29 = vector.broadcast %28 : vector<1x128xf32> to vector<16x128xf32>
    %30 = arith.addf %27, %29 : vector<16x128xf32>
    %31 = arith.truncf %30 : vector<16x128xf32> to vector<16x128xbf16>
    %c0_16 = arith.constant 0 : index
    %c0_17 = arith.constant 0 : index
    %32 = vector.load %arg7[%c0_16, %c0_17] : memref<16x128xbf16, #tpu.memory_space<vmem>>, vector<16x128xbf16>
    tpu.vector_store %arg7[%c0_16, %c0_17], %31 {strides = array<i32>} : memref<16x128xbf16, #tpu.memory_space<vmem>>, vector<16x128xbf16>,
    return
  }
  func.func @transform_0(%arg0: i32) -> (i32, i32) {
    %c0_i32 = arith.constant 0 : i32
    %c0_i32_0 = arith.constant 0 : i32
    return %arg0, %c0_i32 : i32, i32
  }
  func.func @transform_1(%arg0: i32) -> (i32, i32) {
    %c0_i32 = arith.constant 0 : i32
    %c0_i32_0 = arith.constant 0 : i32
    %c0_i32_1 = arith.constant 0 : i32
    return %c0_i32, %c0_i32_0 : i32, i32
  }
  func.func @transform_2(%arg0: i32) -> (i32, i32) {
    %c0_i32 = arith.constant 0 : i32
    %c0_i32_0 = arith.constant 0 : i32
    %c0_i32_1 = arith.constant 0 : i32
    return %c0_i32, %c0_i32_0 : i32, i32
  }
  func.func @transform_3(%arg0: i32) -> (i32, i32) {
    %c0_i32 = arith.constant 0 : i32
    %c0_i32_0 = arith.constant 0 : i32
    return %arg0, %c0_i32 : i32, i32
  }
  func.func @transform_4(%arg0: i32) -> (i32, i32) {
    %c0_i32 = arith.constant 0 : i32
    %c0_i32_0 = arith.constant 0 : i32
    %c0_i32_1 = arith.constant 0 : i32
    return %c0_i32, %c0_i32_0 : i32, i32
  }
  func.func @transform_5(%arg0: i32) -> (i32, i32) {
    %c0_i32 = arith.constant 0 : i32
    %c0_i32_0 = arith.constant 0 : i32
    %c0_i32_1 = arith.constant 0 : i32
    return %c0_i32, %c0_i32_0 : i32, i32
  }
  func.func @transform_6(%arg0: i32) -> (i32, i32) {
    %c0_i32 = arith.constant 0 : i32
    %c0_i32_0 = arith.constant 0 : i32
    return %arg0, %c0_i32 : i32, i32
  }
}

module attributes {stable_mosaic.version = 11 : i64} {
  func.func @_dense_kernel(%arg0: i32, %arg1: memref<16x128xbf16, #tpu.memory_space<vmem>>, %arg2: memref<128x256xbf16, #tpu.memory_space<vmem>>, %arg3: memref<1x256xf32, #tpu.memory_space<vmem>>, %arg4: memref<16x256xbf16, #tpu.memory_space<vmem>>) attributes {dimension_semantics = [#tpu.dimension_semantics<parallel>], iteration_bounds = array<i64: 1>, scalar_prefetch = 0 : i64, scratch_operands = 0 : i64, tpu.core_type = #tpu.core_type<tc>, window_params = [{transform_indices = @transform_0, window_bounds = array<i64: 16, 128>}, {pipeline_mode = #tpu.pipeline_mode<synchronous>, transform_indices = @transform_1, window_bounds = array<i64: 128, 256>}, {pipeline_mode = #tpu.pipeline_mode<synchronous>, transform_indices = @transform_2, window_bounds = array<i64: 1, 256>}, {transform_indices = @transform_3, window_bounds = array<i64: 16, 256>}]} {
    %c0 = arith.constant 0 : index
    %c0_0 = arith.constant 0 : index
    %0 = vector.load %arg1[%c0, %c0_0] : memref<16x128xbf16, #tpu.memory_space<vmem>>, vector<16x128xbf16>
    %c0_1 = arith.constant 0 : index
    %c0_2 = arith.constant 0 : index
    %1 = vector.load %arg2[%c0_1, %c0_2] : memref<128x256xbf16, #tpu.memory_space<vmem>>, vector<128x256xbf16>
    %cst = arith.constant dense<0.000000e+00> : vector<16x256xf32>
    %2 = tpu.matmul %0, %1, %cst {dimension_numbers = #tpu.dot_dimension_numbers<[1], [0], [0], [1], [0, 0, 1, 1], [], []>} : vector<16x128xbf16>, vector<128x256xbf16>, vector<16x256xf32> -> vector<16x256xf32>
    %c0_3 = arith.constant 0 : index
    %c0_4 = arith.constant 0 : index
    %3 = vector.load %arg3[%c0_3, %c0_4] : memref<1x256xf32, #tpu.memory_space<vmem>>, vector<1x256xf32>
    %4 = vector.broadcast %3 : vector<1x256xf32> to vector<16x256xf32>
    %5 = arith.addf %2, %4 : vector<16x256xf32>
    %cst_5 = arith.constant 5.000000e-01 : f32
    %6 = vector.broadcast %cst_5 : f32 to vector<16x256xf32>
    %7 = arith.mulf %6, %5 : vector<16x256xf32>
    %cst_6 = arith.constant 0.707106769 : f32
    %8 = vector.broadcast %cst_6 : f32 to vector<16x256xf32>
    %9 = arith.mulf %5, %8 : vector<16x256xf32>
    %10 = math.absf %9 : vector<16x256xf32>
    %cst_7 = arith.constant 0.327591091 : f32
    %11 = vector.broadcast %cst_7 : f32 to vector<16x256xf32>
    %12 = arith.mulf %11, %10 : vector<16x256xf32>
    %cst_8 = arith.constant 1.000000e+00 : f32
    %13 = vector.broadcast %cst_8 : f32 to vector<16x256xf32>
    %14 = arith.addf %13, %12 : vector<16x256xf32>
    %cst_9 = arith.constant 1.000000e+00 : f32
    %15 = vector.broadcast %cst_9 : f32 to vector<16x256xf32>
    %16 = arith.divf %15, %14 : vector<16x256xf32>
    %cst_10 = arith.constant 1.06140542 : f32
    %17 = vector.broadcast %cst_10 : f32 to vector<16x256xf32>
    %18 = arith.mulf %17, %16 : vector<16x256xf32>
    %cst_11 = arith.constant -1.45315206 : f32
    %19 = vector.broadcast %cst_11 : f32 to vector<16x256xf32>
    %20 = arith.addf %18, %19 : vector<16x256xf32>
    %21 = arith.mulf %20, %16 : vector<16x256xf32>
    %cst_12 = arith.constant 1.42141378 : f32
    %22 = vector.broadcast %cst_12 : f32 to vector<16x256xf32>
    %23 = arith.addf %21, %22 : vector<16x256xf32>
    %24 = arith.mulf %23, %16 : vector<16x256xf32>
    %cst_13 = arith.constant -0.284496725 : f32
    %25 = vector.broadcast %cst_13 : f32 to vector<16x256xf32>
    %26 = arith.addf %24, %25 : vector<16x256xf32>
    %27 = arith.mulf %26, %16 : vector<16x256xf32>
    %cst_14 = arith.constant 0.254829586 : f32
    %28 = vector.broadcast %cst_14 : f32 to vector<16x256xf32>
    %29 = arith.addf %27, %28 : vector<16x256xf32>
    %30 = arith.mulf %29, %16 : vector<16x256xf32>
    %cst_15 = arith.constant 0.000000e+00 : f32
    %31 = vector.broadcast %cst_15 : f32 to vector<16x256xf32>
    %32 = arith.subf %31, %10 : vector<16x256xf32>
    %33 = arith.mulf %32, %10 : vector<16x256xf32>
    %34 = math.exp %33 : vector<16x256xf32>
    %35 = arith.mulf %30, %34 : vector<16x256xf32>
    %cst_16 = arith.constant 1.000000e+00 : f32
    %36 = vector.broadcast %cst_16 : f32 to vector<16x256xf32>
    %37 = arith.subf %36, %35 : vector<16x256xf32>
    %cst_17 = arith.constant 0.000000e+00 : f32
    %38 = vector.broadcast %cst_17 : f32 to vector<16x256xf32>
    %39 = arith.cmpf olt, %9, %38 : vector<16x256xf32>
    %cst_18 = arith.constant 0.000000e+00 : f32
    %40 = vector.broadcast %cst_18 : f32 to vector<16x256xf32>
    %41 = arith.subf %40, %37 : vector<16x256xf32>
    %42 = arith.select %39, %41, %37 : vector<16x256xi1>, vector<16x256xf32>
    %cst_19 = arith.constant 1.000000e+00 : f32
    %43 = vector.broadcast %cst_19 : f32 to vector<16x256xf32>
    %44 = arith.addf %43, %42 : vector<16x256xf32>
    %45 = arith.mulf %7, %44 : vector<16x256xf32>
    %46 = arith.truncf %45 : vector<16x256xf32> to vector<16x256xbf16>
    %c0_20 = arith.constant 0 : index
    %c0_21 = arith.constant 0 : index
    %47 = vector.load %arg4[%c0_20, %c0_21] : memref<16x256xbf16, #tpu.memory_space<vmem>>, vector<16x256xbf16>
    tpu.vector_store %arg4[%c0_20, %c0_21], %46 {strides = array<i32>} : memref<16x256xbf16, #tpu.memory_space<vmem>>, vector<16x256xbf16>,
    return
  }
  func.func @transform_0(%arg0: i32) -> (i32, i32) {
    %c0_i32 = arith.constant 0 : i32
    %c0_i32_0 = arith.constant 0 : i32
    return %arg0, %c0_i32 : i32, i32
  }
  func.func @transform_1(%arg0: i32) -> (i32, i32) {
    %c0_i32 = arith.constant 0 : i32
    %c0_i32_0 = arith.constant 0 : i32
    %c0_i32_1 = arith.constant 0 : i32
    return %c0_i32, %c0_i32_0 : i32, i32
  }
  func.func @transform_2(%arg0: i32) -> (i32, i32) {
    %c0_i32 = arith.constant 0 : i32
    %c0_i32_0 = arith.constant 0 : i32
    %c0_i32_1 = arith.constant 0 : i32
    return %c0_i32, %c0_i32_0 : i32, i32
  }
  func.func @transform_3(%arg0: i32) -> (i32, i32) {
    %c0_i32 = arith.constant 0 : i32
    %c0_i32_0 = arith.constant 0 : i32
    return %arg0, %c0_i32 : i32, i32
  }
}

module attributes {stable_mosaic.version = 11 : i64} {
  func.func @_dense_add_ln_kernel(%arg0: i32, %arg1: memref<16x256xbf16, #tpu.memory_space<vmem>>, %arg2: memref<256x128xbf16, #tpu.memory_space<vmem>>, %arg3: memref<1x128xf32, #tpu.memory_space<vmem>>, %arg4: memref<16x128xbf16, #tpu.memory_space<vmem>>, %arg5: memref<1x128xf32, #tpu.memory_space<vmem>>, %arg6: memref<1x128xf32, #tpu.memory_space<vmem>>, %arg7: memref<16x128xbf16, #tpu.memory_space<vmem>>) attributes {dimension_semantics = [#tpu.dimension_semantics<parallel>], iteration_bounds = array<i64: 1>, scalar_prefetch = 0 : i64, scratch_operands = 0 : i64, tpu.core_type = #tpu.core_type<tc>, window_params = [{transform_indices = @transform_0, window_bounds = array<i64: 16, 256>}, {pipeline_mode = #tpu.pipeline_mode<synchronous>, transform_indices = @transform_1, window_bounds = array<i64: 256, 128>}, {pipeline_mode = #tpu.pipeline_mode<synchronous>, transform_indices = @transform_2, window_bounds = array<i64: 1, 128>}, {transform_indices = @transform_3, window_bounds = array<i64: 16, 128>}, {pipeline_mode = #tpu.pipeline_mode<synchronous>, transform_indices = @transform_4, window_bounds = array<i64: 1, 128>}, {pipeline_mode = #tpu.pipeline_mode<synchronous>, transform_indices = @transform_5, window_bounds = array<i64: 1, 128>}, {transform_indices = @transform_6, window_bounds = array<i64: 16, 128>}]} {
    %c0 = arith.constant 0 : index
    %c0_0 = arith.constant 0 : index
    %0 = vector.load %arg1[%c0, %c0_0] : memref<16x256xbf16, #tpu.memory_space<vmem>>, vector<16x256xbf16>
    %c0_1 = arith.constant 0 : index
    %c0_2 = arith.constant 0 : index
    %1 = vector.load %arg2[%c0_1, %c0_2] : memref<256x128xbf16, #tpu.memory_space<vmem>>, vector<256x128xbf16>
    %cst = arith.constant dense<0.000000e+00> : vector<16x128xf32>
    %2 = tpu.matmul %0, %1, %cst {dimension_numbers = #tpu.dot_dimension_numbers<[1], [0], [0], [1], [0, 0, 1, 1], [], []>} : vector<16x256xbf16>, vector<256x128xbf16>, vector<16x128xf32> -> vector<16x128xf32>
    %c0_3 = arith.constant 0 : index
    %c0_4 = arith.constant 0 : index
    %3 = vector.load %arg3[%c0_3, %c0_4] : memref<1x128xf32, #tpu.memory_space<vmem>>, vector<1x128xf32>
    %4 = vector.broadcast %3 : vector<1x128xf32> to vector<16x128xf32>
    %5 = arith.addf %2, %4 : vector<16x128xf32>
    %c0_5 = arith.constant 0 : index
    %c0_6 = arith.constant 0 : index
    %6 = vector.load %arg4[%c0_5, %c0_6] : memref<16x128xbf16, #tpu.memory_space<vmem>>, vector<16x128xbf16>
    %7 = arith.extf %6 : vector<16x128xbf16> to vector<16x128xf32>
    %8 = arith.addf %5, %7 : vector<16x128xf32>
    %cst_7 = arith.constant dense<0.000000e+00> : vector<16xf32>
    %9 = vector.multi_reduction <add>, %8, %cst_7 [1] : vector<16x128xf32> to vector<16xf32>
    %10 = vector.shape_cast %9 : vector<16xf32> to vector<16x1xf32>
    %cst_8 = arith.constant 1.280000e+02 : f32
    %11 = vector.broadcast %cst_8 : f32 to vector<16x1xf32>
    %12 = arith.divf %10, %11 : vector<16x1xf32>
    %13 = vector.broadcast %12 : vector<16x1xf32> to vector<16x128xf32>
    %14 = arith.subf %8, %13 : vector<16x128xf32>
    %15 = arith.mulf %14, %14 : vector<16x128xf32>
    %cst_9 = arith.constant dense<0.000000e+00> : vector<16xf32>
    %16 = vector.multi_reduction <add>, %15, %cst_9 [1] : vector<16x128xf32> to vector<16xf32>
    %17 = vector.shape_cast %16 : vector<16xf32> to vector<16x1xf32>
    %cst_10 = arith.constant 1.280000e+02 : f32
    %18 = vector.broadcast %cst_10 : f32 to vector<16x1xf32>
    %19 = arith.divf %17, %18 : vector<16x1xf32>
    %cst_11 = arith.constant 9.99999996E-13 : f32
    %20 = vector.broadcast %cst_11 : f32 to vector<16x1xf32>
    %21 = arith.addf %19, %20 : vector<16x1xf32>
    %22 = math.rsqrt %21 : vector<16x1xf32>
    %23 = vector.broadcast %22 : vector<16x1xf32> to vector<16x128xf32>
    %24 = arith.mulf %14, %23 : vector<16x128xf32>
    %c0_12 = arith.constant 0 : index
    %c0_13 = arith.constant 0 : index
    %25 = vector.load %arg5[%c0_12, %c0_13] : memref<1x128xf32, #tpu.memory_space<vmem>>, vector<1x128xf32>
    %26 = vector.broadcast %25 : vector<1x128xf32> to vector<16x128xf32>
    %27 = arith.mulf %24, %26 : vector<16x128xf32>
    %c0_14 = arith.constant 0 : index
    %c0_15 = arith.constant 0 : index
    %28 = vector.load %arg6[%c0_14, %c0_15] : memref<1x128xf32, #tpu.memory_space<vmem>>, vector<1x128xf32>
    %29 = vector.broadcast %28 : vector<1x128xf32> to vector<16x128xf32>
    %30 = arith.addf %27, %29 : vector<16x128xf32>
    %31 = arith.truncf %30 : vector<16x128xf32> to vector<16x128xbf16>
    %c0_16 = arith.constant 0 : index
    %c0_17 = arith.constant 0 : index
    %32 = vector.load %arg7[%c0_16, %c0_17] : memref<16x128xbf16, #tpu.memory_space<vmem>>, vector<16x128xbf16>
    tpu.vector_store %arg7[%c0_16, %c0_17], %31 {strides = array<i32>} : memref<16x128xbf16, #tpu.memory_space<vmem>>, vector<16x128xbf16>,
    return
  }
  func.func @transform_0(%arg0: i32) -> (i32, i32) {
    %c0_i32 = arith.constant 0 : i32
    %c0_i32_0 = arith.constant 0 : i32
    return %arg0, %c0_i32 : i32, i32
  }
  func.func @transform_1(%arg0: i32) -> (i32, i32) {
    %c0_i32 = arith.constant 0 : i32
    %c0_i32_0 = arith.constant 0 : i32
    %c0_i32_1 = arith.constant 0 : i32
    return %c0_i32, %c0_i32_0 : i32, i32
  }
  func.func @transform_2(%arg0: i32) -> (i32, i32) {
    %c0_i32 = arith.constant 0 : i32
    %c0_i32_0 = arith.constant 0 : i32
    %c0_i32_1 = arith.constant 0 : i32
    return %c0_i32, %c0_i32_0 : i32, i32
  }
  func.func @transform_3(%arg0: i32) -> (i32, i32) {
    %c0_i32 = arith.constant 0 : i32
    %c0_i32_0 = arith.constant 0 : i32
    return %arg0, %c0_i32 : i32, i32
  }
  func.func @transform_4(%arg0: i32) -> (i32, i32) {
    %c0_i32 = arith.constant 0 : i32
    %c0_i32_0 = arith.constant 0 : i32
    %c0_i32_1 = arith.constant 0 : i32
    return %c0_i32, %c0_i32_0 : i32, i32
  }
  func.func @transform_5(%arg0: i32) -> (i32, i32) {
    %c0_i32 = arith.constant 0 : i32
    %c0_i32_0 = arith.constant 0 : i32
    %c0_i32_1 = arith.constant 0 : i32
    return %c0_i32, %c0_i32_0 : i32, i32
  }
  func.func @transform_6(%arg0: i32) -> (i32, i32) {
    %c0_i32 = arith.constant 0 : i32
    %c0_i32_0 = arith.constant 0 : i32
    return %arg0, %c0_i32 : i32, i32
  }
}

module attributes {stable_mosaic.version = 11 : i64} {
  func.func @_dense_add_ln_kernel(%arg0: i32, %arg1: memref<16x256xbf16, #tpu.memory_space<vmem>>, %arg2: memref<256x128xbf16, #tpu.memory_space<vmem>>, %arg3: memref<1x128xf32, #tpu.memory_space<vmem>>, %arg4: memref<16x128xbf16, #tpu.memory_space<vmem>>, %arg5: memref<1x128xf32, #tpu.memory_space<vmem>>, %arg6: memref<1x128xf32, #tpu.memory_space<vmem>>, %arg7: memref<16x128xbf16, #tpu.memory_space<vmem>>) attributes {dimension_semantics = [#tpu.dimension_semantics<parallel>], iteration_bounds = array<i64: 1>, scalar_prefetch = 0 : i64, scratch_operands = 0 : i64, tpu.core_type = #tpu.core_type<tc>, window_params = [{transform_indices = @transform_0, window_bounds = array<i64: 16, 256>}, {pipeline_mode = #tpu.pipeline_mode<synchronous>, transform_indices = @transform_1, window_bounds = array<i64: 256, 128>}, {pipeline_mode = #tpu.pipeline_mode<synchronous>, transform_indices = @transform_2, window_bounds = array<i64: 1, 128>}, {transform_indices = @transform_3, window_bounds = array<i64: 16, 128>}, {pipeline_mode = #tpu.pipeline_mode<synchronous>, transform_indices = @transform_4, window_bounds = array<i64: 1, 128>}, {pipeline_mode = #tpu.pipeline_mode<synchronous>, transform_indices = @transform_5, window_bounds = array<i64: 1, 128>}, {transform_indices = @transform_6, window_bounds = array<i64: 16, 128>}]} {
    %c0 = arith.constant 0 : index
    %c0_0 = arith.constant 0 : index
    %0 = vector.load %arg1[%c0, %c0_0] : memref<16x256xbf16, #tpu.memory_space<vmem>>, vector<16x256xbf16>
    %c0_1 = arith.constant 0 : index
    %c0_2 = arith.constant 0 : index
    %1 = vector.load %arg2[%c0_1, %c0_2] : memref<256x128xbf16, #tpu.memory_space<vmem>>, vector<256x128xbf16>
    %cst = arith.constant dense<0.000000e+00> : vector<16x128xf32>
    %2 = tpu.matmul %0, %1, %cst {dimension_numbers = #tpu.dot_dimension_numbers<[1], [0], [0], [1], [0, 0, 1, 1], [], []>} : vector<16x256xbf16>, vector<256x128xbf16>, vector<16x128xf32> -> vector<16x128xf32>
    %c0_3 = arith.constant 0 : index
    %c0_4 = arith.constant 0 : index
    %3 = vector.load %arg3[%c0_3, %c0_4] : memref<1x128xf32, #tpu.memory_space<vmem>>, vector<1x128xf32>
    %4 = vector.broadcast %3 : vector<1x128xf32> to vector<16x128xf32>
    %5 = arith.addf %2, %4 : vector<16x128xf32>
    %c0_5 = arith.constant 0 : index
    %c0_6 = arith.constant 0 : index
    %6 = vector.load %arg4[%c0_5, %c0_6] : memref<16x128xbf16, #tpu.memory_space<vmem>>, vector<16x128xbf16>
    %7 = arith.extf %6 : vector<16x128xbf16> to vector<16x128xf32>
    %8 = arith.addf %5, %7 : vector<16x128xf32>
    %cst_7 = arith.constant dense<0.000000e+00> : vector<16xf32>
    %9 = vector.multi_reduction <add>, %8, %cst_7 [1] : vector<16x128xf32> to vector<16xf32>
    %10 = vector.shape_cast %9 : vector<16xf32> to vector<16x1xf32>
    %cst_8 = arith.constant 1.280000e+02 : f32
    %11 = vector.broadcast %cst_8 : f32 to vector<16x1xf32>
    %12 = arith.divf %10, %11 : vector<16x1xf32>
    %13 = vector.broadcast %12 : vector<16x1xf32> to vector<16x128xf32>
    %14 = arith.subf %8, %13 : vector<16x128xf32>
    %15 = arith.mulf %14, %14 : vector<16x128xf32>
    %cst_9 = arith.constant dense<0.000000e+00> : vector<16xf32>
    %16 = vector.multi_reduction <add>, %15, %cst_9 [1] : vector<16x128xf32> to vector<16xf32>
    %17 = vector.shape_cast %16 : vector<16xf32> to vector<16x1xf32>
    %cst_10 = arith.constant 1.280000e+02 : f32
    %18 = vector.broadcast %cst_10 : f32 to vector<16x1xf32>
    %19 = arith.divf %17, %18 : vector<16x1xf32>
    %cst_11 = arith.constant 9.99999996E-13 : f32
    %20 = vector.broadcast %cst_11 : f32 to vector<16x1xf32>
    %21 = arith.addf %19, %20 : vector<16x1xf32>
    %22 = math.rsqrt %21 : vector<16x1xf32>
    %23 = vector.broadcast %22 : vector<16x1xf32> to vector<16x128xf32>
    %24 = arith.mulf %14, %23 : vector<16x128xf32>
    %c0_12 = arith.constant 0 : index
    %c0_13 = arith.constant 0 : index
    %25 = vector.load %arg5[%c0_12, %c0_13] : memref<1x128xf32, #tpu.memory_space<vmem>>, vector<1x128xf32>
    %26 = vector.broadcast %25 : vector<1x128xf32> to vector<16x128xf32>
    %27 = arith.mulf %24, %26 : vector<16x128xf32>
    %c0_14 = arith.constant 0 : index
    %c0_15 = arith.constant 0 : index
    %28 = vector.load %arg6[%c0_14, %c0_15] : memref<1x128xf32, #tpu.memory_space<vmem>>, vector<1x128xf32>
    %29 = vector.broadcast %28 : vector<1x128xf32> to vector<16x128xf32>
    %30 = arith.addf %27, %29 : vector<16x128xf32>
    %31 = arith.truncf %30 : vector<16x128xf32> to vector<16x128xbf16>
    %c0_16 = arith.constant 0 : index
    %c0_17 = arith.constant 0 : index
    %32 = vector.load %arg7[%c0_16, %c0_17] : memref<16x128xbf16, #tpu.memory_space<vmem>>, vector<16x128xbf16>
    tpu.vector_store %arg7[%c0_16, %c0_17], %31 {strides = array<i32>} : memref<16x128xbf16, #tpu.memory_space<vmem>>, vector<16x128xbf16>,
    return
  }
  func.func @transform_0(%arg0: i32) -> (i32, i32) {
    %c0_i32 = arith.constant 0 : i32
    %c0_i32_0 = arith.constant 0 : i32
    return %arg0, %c0_i32 : i32, i32
  }
  func.func @transform_1(%arg0: i32) -> (i32, i32) {
    %c0_i32 = arith.constant 0 : i32
    %c0_i32_0 = arith.constant 0 : i32
    %c0_i32_1 = arith.constant 0 : i32
    return %c0_i32, %c0_i32_0 : i32, i32
  }
  func.func @transform_2(%arg0: i32) -> (i32, i32) {
    %c0_i32 = arith.constant 0 : i32
    %c0_i32_0 = arith.constant 0 : i32
    %c0_i32_1 = arith.constant 0 : i32
    return %c0_i32, %c0_i32_0 : i32, i32
  }
  func.func @transform_3(%arg0: i32) -> (i32, i32) {
    %c0_i32 = arith.constant 0 : i32
    %c0_i32_0 = arith.constant 0 : i32
    return %arg0, %c0_i32 : i32, i32
  }
  func.func @transform_4(%arg0: i32) -> (i32, i32) {
    %c0_i32 = arith.constant 0 : i32
    %c0_i32_0 = arith.constant 0 : i32
    %c0_i32_1 = arith.constant 0 : i32
    return %c0_i32, %c0_i32_0 : i32, i32
  }
  func.func @transform_5(%arg0: i32) -> (i32, i32) {
    %c0_i32 = arith.constant 0 : i32
    %c0_i32_0 = arith.constant 0 : i32
    %c0_i32_1 = arith.constant 0 : i32
    return %c0_i32, %c0_i32_0 : i32, i32
  }
  func.func @transform_6(%arg0: i32) -> (i32, i32) {
    %c0_i32 = arith.constant 0 : i32
    %c0_i32_0 = arith.constant 0 : i32
    return %arg0, %c0_i32 : i32, i32
  }
}

</mosaic_0001>

<llo_original>
// kernel: _forward.10
$region0: #{_forward.10}
  #allocation0 [shape = 'u32[]', space=smem, size = 0x4, offset = 0x4, fixed_abs, tag = 'smem constant byte address 0x4 - core index']
  #allocation1 [shape = 'u32[144,128]{1,0:T(1,128)}', space=vmem, size = 0x12000, scoped, tag = 'internal scratch']
  %s0 = inlined_call_operand.vmem [shape: bf16[16,128], index: 0, kind: input, shape index: {}]
  %s1 = inlined_call_operand.vmem [shape: bf16[128,384], index: 1, kind: input, shape index: {}]
  %s2 = inlined_call_operand.vmem [shape: f32[1,384], index: 2, kind: input, shape index: {}]
  %s3 = inlined_call_operand.vmem [shape: bf16[16,384], index: 3, kind: output, shape index: {}]
  %s4 = sld [smem:[#allocation0]]
  $region22: #{_forward.10} parent=0
    _
  %s6 = ssub.s32 1, %s4
  %s7 = scalar_select 0, %s6, %s4
  // Predicated region
  $region2: #{_forward.10} parent=0 // pred_check
    _
  $region3: #{_forward.10} parent=0 // pred_check_branch
    %9 = sbr.rel (0) target = $region5
  $region4: #{_forward.10} parent=0 // pred_region
    _
  $region5: #{_forward.10} parent=0 // pred_fallthru
    _
  // Predicated region
  $region6: #{_forward.10} parent=0 // pred_check
    _
  $region7: #{_forward.10} parent=0 // pred_check_branch
    %11 = sbr.rel (0) target = $region9
  $region8: #{_forward.10} parent=0 // pred_region
    _
  $region9: #{_forward.10} parent=0 // pred_fallthru
    _
  // Predicated region
  $region10: #{_forward.10} parent=0 // pred_check
    _
  $region11: #{_forward.10} parent=0 // pred_check_branch
    %13 = sbr.rel (0) target = $region13
  $region12: #{_forward.10} parent=0 // pred_region
    _
  $region13: #{_forward.10} parent=0 // pred_fallthru
    _
  %v15 = vld [vmem:[%s0] sm:$0xf]
  %v16 = vld [vmem:[%s0 + $0x4] sm:$0xf]
  %v17 = vld [vmem:[%s1] sm:$0xff]
  %v18 = vld [vmem:[%s1 + $0x8] sm:$0xf]
  %v19 = vld [vmem:[%s1 + $0xc] sm:$0xff]
  %v20 = vld [vmem:[%s1 + $0x14] sm:$0xf]
  %v21 = vld [vmem:[%s1 + $0x18] sm:$0xff]
  %v22 = vld [vmem:[%s1 + $0x20] sm:$0xf]
  %v23 = vld [vmem:[%s1 + $0x24] sm:$0xff]
  %v24 = vld [vmem:[%s1 + $0x2c] sm:$0xf]
  %v25 = vld [vmem:[%s1 + $0x30] sm:$0xff]
  %v26 = vld [vmem:[%s1 + $0x38] sm:$0xf]
  %v27 = vld [vmem:[%s1 + $0x3c] sm:$0xff]
  %v28 = vld [vmem:[%s1 + $0x44] sm:$0xf]
  %v29 = vld [vmem:[%s1 + $0x48] sm:$0xff]
  %v30 = vld [vmem:[%s1 + $0x50] sm:$0xf]
  %v31 = vld [vmem:[%s1 + $0x54] sm:$0xff]
  %v32 = vld [vmem:[%s1 + $0x5c] sm:$0xf]
  %v33 = vld [vmem:[%s1 + $0x60] sm:$0xff]
  %v34 = vld [vmem:[%s1 + $0x68] sm:$0xf]
  %v35 = vld [vmem:[%s1 + $0x6c] sm:$0xff]
  %v36 = vld [vmem:[%s1 + $0x74] sm:$0xf]
  %v37 = vld [vmem:[%s1 + $0x78] sm:$0xff]
  %v38 = vld [vmem:[%s1 + $0x80] sm:$0xf]
  %v39 = vld [vmem:[%s1 + $0x84] sm:$0xff]
  %v40 = vld [vmem:[%s1 + $0x8c] sm:$0xf]
  %v41 = vld [vmem:[%s1 + $0x90] sm:$0xff]
  %v42 = vld [vmem:[%s1 + $0x98] sm:$0xf]
  %v43 = vld [vmem:[%s1 + $0x9c] sm:$0xff]
  %v44 = vld [vmem:[%s1 + $0xa4] sm:$0xf]
  %v45 = vld [vmem:[%s1 + $0xa8] sm:$0xff]
  %v46 = vld [vmem:[%s1 + $0xb0] sm:$0xf]
  %v47 = vld [vmem:[%s1 + $0xb4] sm:$0xff]
  %v48 = vld [vmem:[%s1 + $0xbc] sm:$0xf]
  %v49 = vld [vmem:[%s2] sm:$0x7]
  %v51 = vlaneseq
  %v52 = vshrl.u32 %v51, 7
  %v53 = vsub.s32 0, %v52
  %v54 = vrot.slane %v49, %v53
  %v55 = vlaneseq
  %v56 = vshrl.u32 %v55, 7
  %v57 = vsub.s32 1, %v56
  %v58 = vrot.slane %v49, %v57
  %v59 = vlaneseq
  %v60 = vshrl.u32 %v59, 7
  %v61 = vsub.s32 2, %v60
  %v62 = vrot.slane %v49, %v61
  %v68 = vunpack.c.l.b16 %v15
  %v69 = vunpack.c.l.b16 %v16
  %v70 = vpack.c.b16 %v69, %v68
  %v104 = vunpack.c.l.b16 %v17
  %v105 = vunpack.c.h.b16 %v17
  %v106 = vunpack.c.l.b16 %v18
  %v107 = vunpack.c.l.b16 %v19
  %v108 = vunpack.c.h.b16 %v19
  %v109 = vunpack.c.l.b16 %v20
  %v110 = vunpack.c.l.b16 %v21
  %v111 = vunpack.c.h.b16 %v21
  %v112 = vunpack.c.l.b16 %v22
  %v113 = vunpack.c.l.b16 %v23
  %v114 = vunpack.c.h.b16 %v23
  %v115 = vunpack.c.l.b16 %v24
  %v116 = vunpack.c.l.b16 %v25
  %v117 = vunpack.c.h.b16 %v25
  %v118 = vunpack.c.l.b16 %v26
  %v119 = vunpack.c.l.b16 %v27
  %v120 = vunpack.c.h.b16 %v27
  %v121 = vunpack.c.l.b16 %v28
  %v122 = vunpack.c.l.b16 %v29
  %v123 = vunpack.c.h.b16 %v29
  %v124 = vunpack.c.l.b16 %v30
  %v125 = vunpack.c.l.b16 %v31
  %v126 = vunpack.c.h.b16 %v31
  %v127 = vunpack.c.l.b16 %v32
  %v128 = vunpack.c.l.b16 %v33
  %v129 = vunpack.c.h.b16 %v33
  %v130 = vunpack.c.l.b16 %v34
  %v131 = vunpack.c.l.b16 %v35
  %v132 = vunpack.c.h.b16 %v35
  %v133 = vunpack.c.l.b16 %v36
  %v134 = vunpack.c.l.b16 %v37
  %v135 = vunpack.c.h.b16 %v37
  %v136 = vunpack.c.l.b16 %v38
  %v137 = vunpack.c.l.b16 %v39
  %v138 = vunpack.c.h.b16 %v39
  %v139 = vunpack.c.l.b16 %v40
  %v140 = vunpack.c.l.b16 %v41
  %v141 = vunpack.c.h.b16 %v41
  %v142 = vunpack.c.l.b16 %v42
  %v143 = vunpack.c.l.b16 %v43
  %v144 = vunpack.c.h.b16 %v43
  %v145 = vunpack.c.l.b16 %v44
  %v146 = vunpack.c.l.b16 %v45
  %v147 = vunpack.c.h.b16 %v45
  %v148 = vunpack.c.l.b16 %v46
  %v149 = vunpack.c.l.b16 %v47
  %v150 = vunpack.c.h.b16 %v47
  %v151 = vunpack.c.l.b16 %v48
  %v152 = vpack.c.b16 %v107, %v104
  %v153 = vpack.c.b16 %v108, %v105
  %v154 = vpack.c.b16 %v109, %v106
  %v155 = vpack.c.b16 %v113, %v110
  %v156 = vpack.c.b16 %v114, %v111
  %v157 = vpack.c.b16 %v115, %v112
  %v158 = vpack.c.b16 %v119, %v116
  %v159 = vpack.c.b16 %v120, %v117
  %v160 = vpack.c.b16 %v121, %v118
  %v161 = vpack.c.b16 %v125, %v122
  %v162 = vpack.c.b16 %v126, %v123
  %v163 = vpack.c.b16 %v127, %v124
  %v164 = vpack.c.b16 %v131, %v128
  %v165 = vpack.c.b16 %v132, %v129
  %v166 = vpack.c.b16 %v133, %v130
  %v167 = vpack.c.b16 %v137, %v134
  %v168 = vpack.c.b16 %v138, %v135
  %v169 = vpack.c.b16 %v139, %v136
  %v170 = vpack.c.b16 %v143, %v140
  %v171 = vpack.c.b16 %v144, %v141
  %v172 = vpack.c.b16 %v145, %v142
  %v173 = vpack.c.b16 %v149, %v146
  %v174 = vpack.c.b16 %v150, %v147
  %v175 = vpack.c.b16 %v151, %v148
  %200 = vmatprep.subr.bf16.mxu0 %v153
  %201 = vmatpush1.bf16.msra.mxu0 %v152
  %202 = vmatprep.subr.bf16.mxu0 %v156
  %203 = vmatpush1.bf16.msra.mxu0 %v155
  %204 = vmatprep.subr.bf16.mxu0 %v159
  %205 = vmatpush1.bf16.msra.mxu0 %v158
  %206 = vmatprep.subr.bf16.mxu0 %v162
  %207 = vmatpush1.bf16.msra.mxu0 %v161
  %208 = vmatprep.subr.bf16.mxu0 %v165
  %209 = vmatpush1.bf16.msra.mxu0 %v164
  %210 = vmatprep.subr.bf16.mxu0 %v168
  %211 = vmatpush1.bf16.msra.mxu0 %v167
  %212 = vmatprep.subr.bf16.mxu0 %v171
  %213 = vmatpush1.bf16.msra.mxu0 %v170
  %214 = vmatprep.subr.bf16.mxu0 %v174
  %215 = vmatpush1.bf16.msra.mxu0 %v173
  %216 = vmatprep.subr.bf16.mxu0 0
  %217 = vmatpush1.bf16.msra.mxu0 0
  %218 = vmatprep.subr.bf16.mxu0 0
  %219 = vmatpush1.bf16.msra.mxu0 0
  %220 = vmatprep.subr.bf16.mxu0 0
  %221 = vmatpush1.bf16.msra.mxu0 0
  %222 = vmatprep.subr.bf16.mxu0 0
  %223 = vmatpush1.bf16.msra.mxu0 0
  %224 = vmatprep.subr.bf16.mxu0 0
  %225 = vmatpush1.bf16.msra.mxu0 0
  %226 = vmatprep.subr.bf16.mxu0 0
  %227 = vmatpush1.bf16.msra.mxu0 0
  %228 = vmatprep.subr.bf16.mxu0 0
  %229 = vmatpush1.bf16.msra.mxu0 0
  %230 = vmatprep.subr.bf16.mxu0 0
  %231 = vmatpush1.bf16.msra.mxu0 0
  %232 = vmatprep.mubr.bf16.mxu0 0
  %233 = vmatmul.mubr.bf16.gmra.mrb[0].mxu0 %v70
  %v234 = vpop.f32.mrb[0].mxu0
  %v235 = vadd.f32 %v54, %v234
  %v236 = vpop.f32.mrb[0].mxu0
  %v237 = vadd.f32 %v58, %v236
  %v238 = vpop.f32.mrb[0].mxu0
  %v239 = vadd.f32 %v54, %v238
  %v240 = vpop.f32.mrb[0].mxu0
  %v241 = vadd.f32 %v58, %v240
  %242 = vdwg.mxu0
  %243 = vmatprep.subr.bf16.mxu0 0
  %244 = vmatpush1.bf16.msra.mxu0 %v154
  %245 = vmatprep.subr.bf16.mxu0 0
  %246 = vmatpush1.bf16.msra.mxu0 %v157
  %247 = vmatprep.subr.bf16.mxu0 0
  %248 = vmatpush1.bf16.msra.mxu0 %v160
  %249 = vmatprep.subr.bf16.mxu0 0
  %250 = vmatpush1.bf16.msra.mxu0 %v163
  %251 = vmatprep.subr.bf16.mxu0 0
  %252 = vmatpush1.bf16.msra.mxu0 %v166
  %253 = vmatprep.subr.bf16.mxu0 0
  %254 = vmatpush1.bf16.msra.mxu0 %v169
  %255 = vmatprep.subr.bf16.mxu0 0
  %256 = vmatpush1.bf16.msra.mxu0 %v172
  %257 = vmatprep.subr.bf16.mxu0 0
  %258 = vmatpush1.bf16.msra.mxu0 %v175
  %259 = vmatprep.subr.bf16.mxu0 0
  %260 = vmatpush1.bf16.msra.mxu0 0
  %261 = vmatprep.subr.bf16.mxu0 0
  %262 = vmatpush1.bf16.msra.mxu0 0
  %263 = vmatprep.subr.bf16.mxu0 0
  %264 = vmatpush1.bf16.msra.mxu0 0
  %265 = vmatprep.subr.bf16.mxu0 0
  %266 = vmatpush1.bf16.msra.mxu0 0
  %267 = vmatprep.subr.bf16.mxu0 0
  %268 = vmatpush1.bf16.msra.mxu0 0
  %269 = vmatprep.subr.bf16.mxu0 0
  %270 = vmatpush1.bf16.msra.mxu0 0
  %271 = vmatprep.subr.bf16.mxu0 0
  %272 = vmatpush1.bf16.msra.mxu0 0
  %273 = vmatprep.subr.bf16.mxu0 0
  %274 = vmatpush1.bf16.msra.mxu0 0
  %275 = vmatprep.mubr.bf16.mxu0 0
  %276 = vmatmul.mubr.bf16.gmra.mrb[0].mxu0 %v70
  %v277 = vpop.f32.mrb[0].mxu0
  %v278 = vadd.f32 %v62, %v277
  %v279 = vpop.f32.mrb[0].mxu0
  %v280 = vpop.f32.mrb[0].mxu0
  %v281 = vadd.f32 %v62, %v280
  %v282 = vpop.f32.mrb[0].mxu0
  %283 = vdwg.mxu0
  %v284 = vpack.c.bf16 %v239, %v235
  %v285 = vpack.c.bf16 %v241, %v237
  %v286 = vpack.c.bf16 %v281, %v278
  %v290 = vunpack.c.l.b16 %v284
  %v291 = vunpack.c.l.b16 %v285
  %v292 = vunpack.c.l.b16 %v286
  %v293 = vunpack.c.h.b16 %v284
  %v294 = vunpack.c.h.b16 %v285
  %v295 = vunpack.c.h.b16 %v286
  %v296 = vpack.c.b16 %v291, %v290
  %v297 = vpack.c.b16 %v292, %v292
  %v298 = vpack.c.b16 %v294, %v293
  %v299 = vpack.c.b16 %v295, %v295
  %304 = vst [vmem:[%s3] sm:$0xff] %v296
  %305 = vst [vmem:[%s3 + $0x8] sm:$0xf] %v297
  %306 = vst [vmem:[%s3 + $0xc] sm:$0xff] %v298
  %307 = vst [vmem:[%s3 + $0x14] sm:$0xf] %v299
  // Predicated region
  $region14: #{_forward.10} parent=0 // pred_check
    _
  $region15: #{_forward.10} parent=0 // pred_check_branch
    %309 = sbr.rel (0) target = $region17
  $region16: #{_forward.10} parent=0 // pred_region
    _
  $region17: #{_forward.10} parent=0 // pred_fallthru
    _
  // Predicated region
  $region18: #{_forward.10} parent=0 // pred_check
    _
  $region19: #{_forward.10} parent=0 // pred_check_branch
    %311 = sbr.rel (0) target = $region21
  $region20: #{_forward.10} parent=0 // pred_region
    _
  $region21: #{_forward.10} parent=0 // pred_fallthru
    _

// kernel: _forward.12
$region0: #{_forward.12}
  #allocation0 [shape = 'u32[]', space=smem, size = 0x4, offset = 0x4, fixed_abs, tag = 'smem constant byte address 0x4 - core index']
  #allocation1 [shape = 'u32[144,128]{1,0:T(1,128)}', space=vmem, size = 0x12000, scoped, tag = 'internal scratch']
  %s0 = inlined_call_operand.vmem [shape: bf16[16,128], index: 0, kind: input, shape index: {}]
  %s1 = inlined_call_operand.vmem [shape: bf16[128,128], index: 1, kind: input, shape index: {}]
  %s2 = inlined_call_operand.vmem [shape: f32[1,128], index: 2, kind: input, shape index: {}]
  %s3 = inlined_call_operand.vmem [shape: bf16[16,128], index: 3, kind: input, shape index: {}]
  %s4 = inlined_call_operand.vmem [shape: f32[1,128], index: 4, kind: input, shape index: {}]
  %s5 = inlined_call_operand.vmem [shape: f32[1,128], index: 5, kind: input, shape index: {}]
  %s6 = inlined_call_operand.vmem [shape: bf16[16,128], index: 6, kind: output, shape index: {}]
  %s7 = sld [smem:[#allocation0]]
  $region34: #{_forward.12} parent=0
    _
  %s9 = ssub.s32 1, %s7
  %s10 = scalar_select 0, %s9, %s7
  // Predicated region
  $region2: #{_forward.12} parent=0 // pred_check
    _
  $region3: #{_forward.12} parent=0 // pred_check_branch
    %12 = sbr.rel (0) target = $region5
  $region4: #{_forward.12} parent=0 // pred_region
    _
  $region5: #{_forward.12} parent=0 // pred_fallthru
    _
  // Predicated region
  $region6: #{_forward.12} parent=0 // pred_check
    _
  $region7: #{_forward.12} parent=0 // pred_check_branch
    %14 = sbr.rel (0) target = $region9
  $region8: #{_forward.12} parent=0 // pred_region
    _
  $region9: #{_forward.12} parent=0 // pred_fallthru
    _
  // Predicated region
  $region10: #{_forward.12} parent=0 // pred_check
    _
  $region11: #{_forward.12} parent=0 // pred_check_branch
    %16 = sbr.rel (0) target = $region13
  $region12: #{_forward.12} parent=0 // pred_region
    _
  $region13: #{_forward.12} parent=0 // pred_fallthru
    _
  // Predicated region
  $region14: #{_forward.12} parent=0 // pred_check
    _
  $region15: #{_forward.12} parent=0 // pred_check_branch
    %18 = sbr.rel (0) target = $region17
  $region16: #{_forward.12} parent=0 // pred_region
    _
  $region17: #{_forward.12} parent=0 // pred_fallthru
    _
  // Predicated region
  $region18: #{_forward.12} parent=0 // pred_check
    _
  $region19: #{_forward.12} parent=0 // pred_check_branch
    %20 = sbr.rel (0) target = $region21
  $region20: #{_forward.12} parent=0 // pred_region
    _
  $region21: #{_forward.12} parent=0 // pred_fallthru
    _
  // Predicated region
  $region22: #{_forward.12} parent=0 // pred_check
    _
  $region23: #{_forward.12} parent=0 // pred_check_branch
    %22 = sbr.rel (0) target = $region25
  $region24: #{_forward.12} parent=0 // pred_region
    _
  $region25: #{_forward.12} parent=0 // pred_fallthru
    _
  %v24 = vld [vmem:[%s0] sm:$0xf]
  %v25 = vld [vmem:[%s0 + $0x4] sm:$0xf]
  %v26 = vld [vmem:[%s1] sm:$0xf]
  %v27 = vld [vmem:[%s1 + $0x4] sm:$0xf]
  %v28 = vld [vmem:[%s1 + $0x8] sm:$0xf]
  %v29 = vld [vmem:[%s1 + $0xc] sm:$0xf]
  %v30 = vld [vmem:[%s1 + $0x10] sm:$0xf]
  %v31 = vld [vmem:[%s1 + $0x14] sm:$0xf]
  %v32 = vld [vmem:[%s1 + $0x18] sm:$0xf]
  %v33 = vld [vmem:[%s1 + $0x1c] sm:$0xf]
  %v34 = vld [vmem:[%s1 + $0x20] sm:$0xf]
  %v35 = vld [vmem:[%s1 + $0x24] sm:$0xf]
  %v36 = vld [vmem:[%s1 + $0x28] sm:$0xf]
  %v37 = vld [vmem:[%s1 + $0x2c] sm:$0xf]
  %v38 = vld [vmem:[%s1 + $0x30] sm:$0xf]
  %v39 = vld [vmem:[%s1 + $0x34] sm:$0xf]
  %v40 = vld [vmem:[%s1 + $0x38] sm:$0xf]
  %v41 = vld [vmem:[%s1 + $0x3c] sm:$0xf]
  %v42 = vld [vmem:[%s2] sm:$0x1]
  %v44 = vlaneseq
  %v45 = vshrl.u32 %v44, 7
  %v46 = vsub.s32 0, %v45
  %v47 = vrot.slane %v42, %v46
  %v51 = vunpack.c.l.b16 %v24
  %v52 = vunpack.c.l.b16 %v25
  %v53 = vpack.c.b16 %v52, %v51
  %v71 = vunpack.c.l.b16 %v26
  %v72 = vunpack.c.l.b16 %v27
  %v73 = vunpack.c.l.b16 %v28
  %v74 = vunpack.c.l.b16 %v29
  %v75 = vunpack.c.l.b16 %v30
  %v76 = vunpack.c.l.b16 %v31
  %v77 = vunpack.c.l.b16 %v32
  %v78 = vunpack.c.l.b16 %v33
  %v79 = vunpack.c.l.b16 %v34
  %v80 = vunpack.c.l.b16 %v35
  %v81 = vunpack.c.l.b16 %v36
  %v82 = vunpack.c.l.b16 %v37
  %v83 = vunpack.c.l.b16 %v38
  %v84 = vunpack.c.l.b16 %v39
  %v85 = vunpack.c.l.b16 %v40
  %v86 = vunpack.c.l.b16 %v41
  %v87 = vpack.c.b16 %v72, %v71
  %v88 = vpack.c.b16 %v74, %v73
  %v89 = vpack.c.b16 %v76, %v75
  %v90 = vpack.c.b16 %v78, %v77
  %v91 = vpack.c.b16 %v80, %v79
  %v92 = vpack.c.b16 %v82, %v81
  %v93 = vpack.c.b16 %v84, %v83
  %v94 = vpack.c.b16 %v86, %v85
  %103 = vmatprep.subr.bf16.mxu0 0
  %104 = vmatpush1.bf16.msra.mxu0 %v87
  %105 = vmatprep.subr.bf16.mxu0 0
  %106 = vmatpush1.bf16.msra.mxu0 %v88
  %107 = vmatprep.subr.bf16.mxu0 0
  %108 = vmatpush1.bf16.msra.mxu0 %v89
  %109 = vmatprep.subr.bf16.mxu0 0
  %110 = vmatpush1.bf16.msra.mxu0 %v90
  %111 = vmatprep.subr.bf16.mxu0 0
  %112 = vmatpush1.bf16.msra.mxu0 %v91
  %113 = vmatprep.subr.bf16.mxu0 0
  %114 = vmatpush1.bf16.msra.mxu0 %v92
  %115 = vmatprep.subr.bf16.mxu0 0
  %116 = vmatpush1.bf16.msra.mxu0 %v93
  %117 = vmatprep.subr.bf16.mxu0 0
  %118 = vmatpush1.bf16.msra.mxu0 %v94
  %119 = vmatprep.subr.bf16.mxu0 0
  %120 = vmatpush1.bf16.msra.mxu0 0
  %121 = vmatprep.subr.bf16.mxu0 0
  %122 = vmatpush1.bf16.msra.mxu0 0
  %123 = vmatprep.subr.bf16.mxu0 0
  %124 = vmatpush1.bf16.msra.mxu0 0
  %125 = vmatprep.subr.bf16.mxu0 0
  %126 = vmatpush1.bf16.msra.mxu0 0
  %127 = vmatprep.subr.bf16.mxu0 0
  %128 = vmatpush1.bf16.msra.mxu0 0
  %129 = vmatprep.subr.bf16.mxu0 0
  %130 = vmatpush1.bf16.msra.mxu0 0
  %131 = vmatprep.subr.bf16.mxu0 0
  %132 = vmatpush1.bf16.msra.mxu0 0
  %133 = vmatprep.subr.bf16.mxu0 0
  %134 = vmatpush1.bf16.msra.mxu0 0
  %135 = vmatprep.mubr.bf16.mxu0 0
  %136 = vmatmul.mubr.bf16.gmra.mrb[0].mxu0 %v53
  %v137 = vpop.f32.mrb[0].mxu0
  %v138 = vadd.f32 %v47, %v137
  %v139 = vpop.f32.mrb[0].mxu0
  %v140 = vpop.f32.mrb[0].mxu0
  %v141 = vadd.f32 %v47, %v140
  %v142 = vpop.f32.mrb[0].mxu0
  %143 = vdwg.mxu0
  %v144 = vld [vmem:[%s3] sm:$0xf]
  %v145 = vld [vmem:[%s3 + $0x4] sm:$0xf]
  %v146 = vunpack.c.l.bf16 %v144
  %v147 = vunpack.c.l.bf16 %v145
  %v148 = vadd.f32 %v138, %v146
  %v149 = vadd.f32 %v141, %v147
  %150 = vadd.xlane.f32.xlu0 %v148
  %v151 = vpop.xlane.xlu0 %150
  %152 = vadd.xlane.f32.xlu0 %v149
  %v153 = vpop.xlane.xlu0 %152
  %v154 = vrcp.pop 128.0
  %v155 = vmul.f32 %v151, %v154
  %v156 = vmul.f32 %v153, %v154
  %v157 = vsub.f32 %v148, %v155
  %v158 = vsub.f32 %v149, %v156
  %v159 = vmul.f32 %v157, %v157
  %v160 = vmul.f32 %v158, %v158
  %161 = vadd.xlane.f32.xlu0 %v159
  %v162 = vpop.xlane.xlu0 %161
  %163 = vadd.xlane.f32.xlu0 %v160
  %v164 = vpop.xlane.xlu0 %163
  %v165 = vmul.f32 %v162, %v154
  %v166 = vmul.f32 %v164, %v154
  %v167 = vadd.f32 %v165, 1e-12
  %v168 = vadd.f32 %v166, 1e-12
  %v169 = vrsqrt.pop %v167
  %v170 = vrsqrt.pop %v168
  %v171 = vmul.f32 %v157, %v169
  %v172 = vmul.f32 %v158, %v170
  %v173 = vld [vmem:[%s4] sm:$0x1]
  %v175 = vlaneseq
  %v176 = vshrl.u32 %v175, 7
  %v177 = vsub.s32 0, %v176
  %v178 = vrot.slane %v173, %v177
  %v180 = vmul.f32 %v171, %v178
  %v181 = vmul.f32 %v172, %v178
  %v182 = vld [vmem:[%s5] sm:$0x1]
  %v184 = vlaneseq
  %v185 = vshrl.u32 %v184, 7
  %v186 = vsub.s32 0, %v185
  %v187 = vrot.slane %v182, %v186
  %v189 = vadd.f32 %v180, %v187
  %v190 = vadd.f32 %v181, %v187
  %v191 = vpack.c.bf16 %v190, %v189
  %v193 = vunpack.c.l.b16 %v191
  %v194 = vunpack.c.h.b16 %v191
  %v195 = vpack.c.b16 %v193, %v193
  %v196 = vpack.c.b16 %v194, %v194
  %199 = vst [vmem:[%s6] sm:$0xf] %v195
  %200 = vst [vmem:[%s6 + $0x4] sm:$0xf] %v196
  // Predicated region
  $region26: #{_forward.12} parent=0 // pred_check
    _
  $region27: #{_forward.12} parent=0 // pred_check_branch
    %202 = sbr.rel (0) target = $region29
  $region28: #{_forward.12} parent=0 // pred_region
    _
  $region29: #{_forward.12} parent=0 // pred_fallthru
    _
  // Predicated region
  $region30: #{_forward.12} parent=0 // pred_check
    _
  $region31: #{_forward.12} parent=0 // pred_check_branch
    %204 = sbr.rel (0) target = $region33
  $region32: #{_forward.12} parent=0 // pred_region
    _
  $region33: #{_forward.12} parent=0 // pred_fallthru
    _

// kernel: _forward.11
$region0: #{_forward.11}
  #allocation0 [shape = 'u32[]', space=smem, size = 0x4, offset = 0x4, fixed_abs, tag = 'smem constant byte address 0x4 - core index']
  #allocation1 [shape = 'u32[144,128]{1,0:T(1,128)}', space=vmem, size = 0x12000, scoped, tag = 'internal scratch']
  #allocation2 [shape = 'f32[2,8,1]{2,1,0:T(8,128)}', space=vmem, size = 0x2000, scoped, tag = 'scratch operand']
  #allocation3 [shape = 'f32[2,8,1]{2,1,0:T(8,128)}', space=vmem, size = 0x2000, scoped, tag = 'scratch operand']
  #allocation4 [shape = 'f32[2,8,64]{2,1,0:T(8,128)}', space=vmem, size = 0x2000, scoped, tag = 'scratch operand']
  %s0 = inlined_call_operand.vmem [shape: bf16[2,8,384], index: 0, kind: input, shape index: {}, may-alias: {0,1,2}]
  %s1 = inlined_call_operand.vmem [shape: bf16[2,8,384], index: 1, kind: input, shape index: {}, may-alias: {0,1,2}]
  %s2 = inlined_call_operand.vmem [shape: bf16[2,8,384], index: 2, kind: input, shape index: {}, may-alias: {0,1,2}]
  %s3 = inlined_call_operand.vmem [shape: f32[2,1,8], index: 3, kind: input, shape index: {}]
  %s4 = inlined_call_operand.vmem [shape: bf16[2,8,128], index: 4, kind: output, shape index: {}]
  %s5 = sld [smem:[#allocation0]]
  $region57: #{_forward.11} parent=0
    _
  %s7 = ssub.s32 1, %s5
  %s8 = scalar_select 0, %s7, %s5
  loop: start=0, step=1, limit=4
  $region2: #{_forward.11} parent=0 // loop_pre_header
    _
  $region3: #{_forward.11} parent=0 // loop_header
    %s10 = sphi 0, %s14
    %p11 = scmp.ge.s32.totalorder %s10, 4
    %s17 = sphi 0, %s36
    %s18 = sphi 0, %s32
    %s19 = sphi 0, %s28
    %s20 = sphi 0, %s17
    %s21 = sphi 0, %s18
    %s22 = sphi 0, %s19
    %s23 = sphi 0, %s20
    %s24 = sphi 0, %s21
    %s25 = sphi 0, %s22
    %s41 = sphi 0, %s43
    %s44 = sphi 0, %s41
    %s45 = sphi 0, %s44
    %s61 = sphi 0, %s45
    %s73 = sphi 0, %s75
    %s76 = sphi 0, %s73
    %s77 = sphi 0, %s76
    %s93 = sphi 0, %s77
    %s105 = sphi 0, %s107
    %s108 = sphi 0, %s105
    %s109 = sphi 0, %s108
    %s125 = sphi 0, %s109
    %s133 = sphi 0, %s135
    %s136 = sphi 0, %s133
    %s137 = sphi 0, %s136
    %s153 = sphi 0, %s137
    %s161 = sphi 0, %s163
    %s164 = sphi 0, %s161
    %s165 = sphi 0, %s164
    %s181 = sphi 0, %s165
  $region4: #{_forward.11} parent=0 // loop_header_branch
    %13 = sbr.rel (%p11) target = $region8
  $region5: #{_forward.11} parent=0 // loop_body
    %s15 = ssub.s32 %s10, 1
    %s16 = ssub.s32 %s10, 2
    %s26 = sadd.s32 1, %s19
    %p27 = scmp.ge.s32.totalorder %s26, 1
    %s28 = scalar_select %p27, 0, %s26
    %s29 = sadd.s32 1, %s18
    %s30 = scalar_select %p27, %s29, %s18
    %p31 = scmp.ge.s32.totalorder %s30, 1
    %s32 = scalar_select %p31, 0, %s30
    %s33 = sadd.s32 1, %s17
    %s34 = scalar_select %p31, %s33, %s17
    %p35 = scmp.ge.s32.totalorder %s34, 2
    %s36 = scalar_select %p35, 0, %s34
    %s37 = ssub.s32 %s17, %s36
    %s38 = ssub.s32 %s18, %s32
    %s39 = sor.u32 %s37, %s38
    %p40 = scmp.eq.s32.totalorder %s39, 0
    %s42 = sadd.s32 %s41, 1
    %s43 = scalar_select %p40, %s41, %s42
    %p46 = pneg %p40
    %p47 = scmp.eq.s32.totalorder %s10, 1
    %p48 = por %p46, %p47
    %p49 = scmp.ne.s32.totalorder %s41, %s44
    %p50 = scmp.eq.s32.totalorder %s10, 0
    %p51 = por %p49, %p50
    %p52 = scmp.ne.s32.totalorder %s41, %s44
    %p53 = scmp.eq.s32.totalorder %s15, 1
    %p54 = por %p52, %p53
    %p55 = scmp.ne.s32.totalorder %s44, %s45
    %p56 = scmp.eq.s32.totalorder %s15, 0
    %p57 = por %p55, %p56
    %p58 = scmp.ne.s32.totalorder %s44, %s45
    %p59 = scmp.eq.s32.totalorder %s16, 1
    %p60 = por %p58, %p59
    %p62 = scmp.ne.s32.totalorder %s45, %s61
    %p63 = scmp.eq.s32.totalorder %s16, 0
    %p64 = por %p62, %p63
    %s65 = sadd.s32 %s18, 1
    %s66 = sadd.s32 %s32, 1
    %s67 = ssub.s32 %s17, %s36
    %s68 = ssub.s32 %s19, %s28
    %s69 = sor.u32 %s67, %s68
    %s70 = ssub.s32 %s65, %s66
    %s71 = sor.u32 %s69, %s70
    %p72 = scmp.eq.s32.totalorder %s71, 0
    %s74 = sadd.s32 %s73, 1
    %s75 = scalar_select %p72, %s73, %s74
    %p78 = pneg %p72
    %p79 = scmp.eq.s32.totalorder %s10, 1
    %p80 = por %p78, %p79
    %p81 = scmp.ne.s32.totalorder %s73, %s76
    %p82 = scmp.eq.s32.totalorder %s10, 0
    %p83 = por %p81, %p82
    %p84 = scmp.ne.s32.totalorder %s73, %s76
    %p85 = scmp.eq.s32.totalorder %s15, 1
    %p86 = por %p84, %p85
    %p87 = scmp.ne.s32.totalorder %s76, %s77
    %p88 = scmp.eq.s32.totalorder %s15, 0
    %p89 = por %p87, %p88
    %p90 = scmp.ne.s32.totalorder %s76, %s77
    %p91 = scmp.eq.s32.totalorder %s16, 1
    %p92 = por %p90, %p91
    %p94 = scmp.ne.s32.totalorder %s77, %s93
    %p95 = scmp.eq.s32.totalorder %s16, 0
    %p96 = por %p94, %p95
    %s97 = sadd.s32 %s18, 2
    %s98 = sadd.s32 %s32, 2
    %s99 = ssub.s32 %s17, %s36
    %s100 = ssub.s32 %s19, %s28
    %s101 = sor.u32 %s99, %s100
    %s102 = ssub.s32 %s97, %s98
    %s103 = sor.u32 %s101, %s102
    %p104 = scmp.eq.s32.totalorder %s103, 0
    %s106 = sadd.s32 %s105, 1
    %s107 = scalar_select %p104, %s105, %s106
    %p110 = pneg %p104
    %p111 = scmp.eq.s32.totalorder %s10, 1
    %p112 = por %p110, %p111
    %p113 = scmp.ne.s32.totalorder %s105, %s108
    %p114 = scmp.eq.s32.totalorder %s10, 0
    %p115 = por %p113, %p114
    %p116 = scmp.ne.s32.totalorder %s105, %s108
    %p117 = scmp.eq.s32.totalorder %s15, 1
    %p118 = por %p116, %p117
    %p119 = scmp.ne.s32.totalorder %s108, %s109
    %p120 = scmp.eq.s32.totalorder %s15, 0
    %p121 = por %p119, %p120
    %p122 = scmp.ne.s32.totalorder %s108, %s109
    %p123 = scmp.eq.s32.totalorder %s16, 1
    %p124 = por %p122, %p123
    %p126 = scmp.ne.s32.totalorder %s109, %s125
    %p127 = scmp.eq.s32.totalorder %s16, 0
    %p128 = por %p126, %p127
    %s129 = ssub.s32 %s17, %s36
    %s130 = ssub.s32 %s19, %s28
    %s131 = sor.u32 %s129, %s130
    %p132 = scmp.eq.s32.totalorder %s131, 0
    %s134 = sadd.s32 %s133, 1
    %s135 = scalar_select %p132, %s133, %s134
    %p138 = pneg %p132
    %p139 = scmp.eq.s32.totalorder %s10, 1
    %p140 = por %p138, %p139
    %p141 = scmp.ne.s32.totalorder %s133, %s136
    %p142 = scmp.eq.s32.totalorder %s10, 0
    %p143 = por %p141, %p142
    %p144 = scmp.ne.s32.totalorder %s133, %s136
    %p145 = scmp.eq.s32.totalorder %s15, 1
    %p146 = por %p144, %p145
    %p147 = scmp.ne.s32.totalorder %s136, %s137
    %p148 = scmp.eq.s32.totalorder %s15, 0
    %p149 = por %p147, %p148
    %p150 = scmp.ne.s32.totalorder %s136, %s137
    %p151 = scmp.eq.s32.totalorder %s16, 1
    %p152 = por %p150, %p151
    %p154 = scmp.ne.s32.totalorder %s137, %s153
    %p155 = scmp.eq.s32.totalorder %s16, 0
    %p156 = por %p154, %p155
    %s157 = ssub.s32 %s17, %s36
    %s158 = ssub.s32 %s18, %s32
    %s159 = sor.u32 %s157, %s158
    %p160 = scmp.eq.s32.totalorder %s159, 0
    %s162 = sadd.s32 %s161, 1
    %s163 = scalar_select %p160, %s161, %s162
    %p166 = pneg %p160
    %p167 = scmp.eq.s32.totalorder %s10, 1
    %p168 = por %p166, %p167
    %p169 = scmp.ne.s32.totalorder %s161, %s164
    %p170 = scmp.eq.s32.totalorder %s10, 0
    %p171 = por %p169, %p170
    %p172 = scmp.ne.s32.totalorder %s161, %s164
    %p173 = scmp.eq.s32.totalorder %s15, 1
    %p174 = por %p172, %p173
    %p175 = scmp.ne.s32.totalorder %s164, %s165
    %p176 = scmp.eq.s32.totalorder %s15, 0
    %p177 = por %p175, %p176
    %p178 = scmp.ne.s32.totalorder %s164, %s165
    %p179 = scmp.eq.s32.totalorder %s16, 1
    %p180 = por %p178, %p179
    %p182 = scmp.ne.s32.totalorder %s165, %s181
    %p183 = scmp.eq.s32.totalorder %s16, 0
    %p184 = por %p182, %p183
    %p185 = scmp.le.s32.totalorder 1, %s10
    %p186 = scmp.lt.s32.totalorder %s10, 3
    %p187 = pnand %p185, %p186
    %p188 = pneg %p187
    // Predicated region
    $region9: #{_forward.11} parent=5 // pred_check
      _
    $region10: #{_forward.11} parent=5 // pred_check_branch
      %190 = sbr.rel (%p187) target = $region12
    $region11: #{_forward.11} parent=5 // pred_region
      %s191 = ssub.s32 %s10, 1
    $region12: #{_forward.11} parent=5 // pred_fallthru
      _
    %p192 = scmp.lt.s32.totalorder %s10, 2
    // Predicated region
    $region13: #{_forward.11} parent=5 // pred_check
      %p193 = pneg %p192
    $region14: #{_forward.11} parent=5 // pred_check_branch
      %195 = sbr.rel (%p193) target = $region16
    $region15: #{_forward.11} parent=5 // pred_region
      // Predicated region
      $region17: #{_forward.11} parent=15 // pred_check
        %p196 = pneg %p51
      $region18: #{_forward.11} parent=15 // pred_check_branch
        %198 = sbr.rel (%p196) target = $region20
      $region19: #{_forward.11} parent=15 // pred_region
        %p199 = scmp.lt.s32.totalorder %s17, 1
        %s200 = scalar_select %p199, %s17, 1
        %p201 = scmp.lt.s32.totalorder %s18, 2
        %s202 = scalar_select %p201, %s18, 2
        %s203 = smul.addr %s200, 3
        %s204 = sadd.s32 %s202, %s203
        %s205 = smul.addr %s204, 4
        %s206 = scalar_lea.vmem %s0, %s205
      $region20: #{_forward.11} parent=15 // pred_fallthru
        _
      // Predicated region
      $region21: #{_forward.11} parent=15 // pred_check
        %p207 = pneg %p83
      $region22: #{_forward.11} parent=15 // pred_check_branch
        %209 = sbr.rel (%p207) target = $region24
      $region23: #{_forward.11} parent=15 // pred_region
        %s210 = sadd.s32 %s18, 1
        %p211 = scmp.lt.s32.totalorder %s17, 1
        %s212 = scalar_select %p211, %s17, 1
        %p213 = scmp.lt.s32.totalorder %s19, 0
        %s214 = scalar_select %p213, %s19, 0
        %p215 = scmp.lt.s32.totalorder %s210, 2
        %s216 = scalar_select %p215, %s210, 2
        %s217 = smul.addr %s214, 3
        %s218 = sadd.s32 %s216, %s217
        %s219 = smul.addr %s212, 3
        %s220 = sadd.s32 %s218, %s219
        %s221 = smul.addr %s220, 4
        %s222 = scalar_lea.vmem %s1, %s221
        %s223 = sadd.s32 %s18, 1
      $region24: #{_forward.11} parent=15 // pred_fallthru
        _
      // Predicated region
      $region25: #{_forward.11} parent=15 // pred_check
        %p224 = pneg %p115
      $region26: #{_forward.11} parent=15 // pred_check_branch
        %226 = sbr.rel (%p224) target = $region28
      $region27: #{_forward.11} parent=15 // pred_region
        %s227 = sadd.s32 %s18, 2
        %p228 = scmp.lt.s32.totalorder %s17, 1
        %s229 = scalar_select %p228, %s17, 1
        %p230 = scmp.lt.s32.totalorder %s19, 0
        %s231 = scalar_select %p230, %s19, 0
        %p232 = scmp.lt.s32.totalorder %s227, 2
        %s233 = scalar_select %p232, %s227, 2
        %s234 = smul.addr %s231, 3
        %s235 = sadd.s32 %s233, %s234
        %s236 = smul.addr %s229, 3
        %s237 = sadd.s32 %s235, %s236
        %s238 = smul.addr %s237, 4
        %s239 = scalar_lea.vmem %s2, %s238
        %s240 = sadd.s32 %s18, 2
      $region28: #{_forward.11} parent=15 // pred_fallthru
        _
      // Predicated region
      $region29: #{_forward.11} parent=15 // pred_check
        %p241 = pneg %p143
      $region30: #{_forward.11} parent=15 // pred_check_branch
        %243 = sbr.rel (%p241) target = $region32
      $region31: #{_forward.11} parent=15 // pred_region
        %p244 = scmp.lt.s32.totalorder %s17, 1
        %s245 = scalar_select %p244, %s17, 1
        %p246 = scmp.lt.s32.totalorder %s19, 0
        %s247 = scalar_select %p246, %s19, 0
        %s248 = sadd.s32 %s247, %s245
        %s249 = scalar_lea.vmem %s3, %s248
      $region32: #{_forward.11} parent=15 // pred_fallthru
        _
    $region16: #{_forward.11} parent=5 // pred_fallthru
      _
    %p250 = scmp.le.s32.totalorder 1, %s10
    %p251 = scmp.lt.s32.totalorder %s10, 3
    %p252 = pnand %p250, %p251
    %p253 = pneg %p252
    // Predicated region
    $region33: #{_forward.11} parent=5 // pred_check
      _
    $region34: #{_forward.11} parent=5 // pred_check_branch
      %255 = sbr.rel (%p252) target = $region36
    $region35: #{_forward.11} parent=5 // pred_region
      %s256 = ssub.s32 %s10, 1
      %p257 = scmp.lt.s32.totalorder %s20, 1
      %s258 = scalar_select %p257, %s20, 1
      %p259 = scmp.lt.s32.totalorder %s21, 2
      %s260 = scalar_select %p259, %s21, 2
      %s261 = smul.addr %s258, 3
      %s262 = sadd.s32 %s260, %s261
      %s263 = smul.addr %s262, 4
      %s264 = scalar_lea.vmem %s0, %s263
      %p265 = pneg %p57
      %p266 = pneg %p54
      %s267 = sadd.s32 %s21, 1
      %p268 = scmp.lt.s32.totalorder %s20, 1
      %s269 = scalar_select %p268, %s20, 1
      %p270 = scmp.lt.s32.totalorder %s22, 0
      %s271 = scalar_select %p270, %s22, 0
      %p272 = scmp.lt.s32.totalorder %s267, 2
      %s273 = scalar_select %p272, %s267, 2
      %s274 = smul.addr %s271, 3
      %s275 = sadd.s32 %s273, %s274
      %s276 = smul.addr %s269, 3
      %s277 = sadd.s32 %s275, %s276
      %s278 = smul.addr %s277, 4
      %s279 = scalar_lea.vmem %s1, %s278
      %p280 = pneg %p89
      %p281 = pneg %p86
      %s282 = sadd.s32 %s21, 2
      %p283 = scmp.lt.s32.totalorder %s20, 1
      %s284 = scalar_select %p283, %s20, 1
      %p285 = scmp.lt.s32.totalorder %s22, 0
      %s286 = scalar_select %p285, %s22, 0
      %p287 = scmp.lt.s32.totalorder %s282, 2
      %s288 = scalar_select %p287, %s282, 2
      %s289 = smul.addr %s286, 3
      %s290 = sadd.s32 %s288, %s289
      %s291 = smul.addr %s284, 3
      %s292 = sadd.s32 %s290, %s291
      %s293 = smul.addr %s292, 4
      %s294 = scalar_lea.vmem %s2, %s293
      %p295 = pneg %p121
      %p296 = pneg %p118
      %p297 = scmp.lt.s32.totalorder %s20, 1
      %s298 = scalar_select %p297, %s20, 1
      %p299 = scmp.lt.s32.totalorder %s22, 0
      %s300 = scalar_select %p299, %s22, 0
      %s301 = sadd.s32 %s300, %s298
      %s302 = scalar_lea.vmem %s3, %s301
      %p303 = pneg %p149
      %p304 = pneg %p146
      %p305 = pneg %p177
      %p306 = pneg %p174
      %p307 = scmp.lt.s32.totalorder %s20, 1
      %s308 = scalar_select %p307, %s20, 1
      %p309 = scmp.lt.s32.totalorder %s21, 0
      %s310 = scalar_select %p309, %s21, 0
      %s311 = sadd.s32 %s310, %s308
      %s312 = smul.addr %s311, 4
      %s313 = scalar_lea.vmem %s4, %s312
      %p314 = scmp.lt.s32.totalorder %s20, 1
      %s315 = scalar_select %p314, %s20, 1
      %p316 = scmp.lt.s32.totalorder %s21, 2
      %s317 = scalar_select %p316, %s21, 2
      %s318 = smul.addr %s315, 3
      %s319 = sadd.s32 %s317, %s318
      %s320 = smul.addr %s319, 4
      %s321 = scalar_lea.vmem %s0, %s320
      %s322 = sadd.s32 %s21, 1
      %p323 = scmp.lt.s32.totalorder %s20, 1
      %s324 = scalar_select %p323, %s20, 1
      %p325 = scmp.lt.s32.totalorder %s22, 0
      %s326 = scalar_select %p325, %s22, 0
      %p327 = scmp.lt.s32.totalorder %s322, 2
      %s328 = scalar_select %p327, %s322, 2
      %s329 = smul.addr %s326, 3
      %s330 = sadd.s32 %s328, %s329
      %s331 = smul.addr %s324, 3
      %s332 = sadd.s32 %s330, %s331
      %s333 = smul.addr %s332, 4
      %s334 = scalar_lea.vmem %s1, %s333
      %s335 = sadd.s32 %s21, 1
      %s336 = sadd.s32 %s21, 2
      %p337 = scmp.lt.s32.totalorder %s20, 1
      %s338 = scalar_select %p337, %s20, 1
      %p339 = scmp.lt.s32.totalorder %s22, 0
      %s340 = scalar_select %p339, %s22, 0
      %p341 = scmp.lt.s32.totalorder %s336, 2
      %s342 = scalar_select %p341, %s336, 2
      %s343 = smul.addr %s340, 3
      %s344 = sadd.s32 %s342, %s343
      %s345 = smul.addr %s338, 3
      %s346 = sadd.s32 %s344, %s345
      %s347 = smul.addr %s346, 4
      %s348 = scalar_lea.vmem %s2, %s347
      %s349 = sadd.s32 %s21, 2
      %p350 = scmp.lt.s32.totalorder %s20, 1
      %s351 = scalar_select %p350, %s20, 1
      %p352 = scmp.lt.s32.totalorder %s22, 0
      %s353 = scalar_select %p352, %s22, 0
      %s354 = sadd.s32 %s353, %s351
      %s355 = scalar_lea.vmem %s3, %s354
      %p356 = scmp.lt.s32.totalorder %s20, 1
      %s357 = scalar_select %p356, %s20, 1
      %p358 = scmp.lt.s32.totalorder %s21, 0
      %s359 = scalar_select %p358, %s21, 0
      %s360 = sadd.s32 %s359, %s357
      %s361 = smul.addr %s360, 4
      %s362 = scalar_lea.vmem %s4, %s361
      %v364 = vld [vmem:[%s355] sm:$0x1]
      %p365 = scmp.eq.s32.totalorder %s22, 0
      // Predicated region
      $region37: #{_forward.11} parent=35 // pred_check
        %p366 = pneg %p365
      $region38: #{_forward.11} parent=35 // pred_check_branch
        %368 = sbr.rel (%p366) target = $region40
      $region39: #{_forward.11} parent=35 // pred_region
        %vm369 = vcmask 7168
        %370 = vst.msk [vmem:[#allocation2] sm:$0xff] %vm369, -inf
        %371 = vst.msk [vmem:[#allocation2 + $0x8] sm:$0xff] %vm369, -inf
        %372 = vst.msk [vmem:[#allocation3] sm:$0xff] %vm369, 0.0
        %373 = vst.msk [vmem:[#allocation3 + $0x8] sm:$0xff] %vm369, 0.0
        %vm374 = vcmask 523264
        %375 = vst.msk [vmem:[#allocation4] sm:$0xff] %vm374, 0.0
        %376 = vst.msk [vmem:[#allocation4 + $0x8] sm:$0xff] %vm374, 0.0
      $region40: #{_forward.11} parent=35 // pred_fallthru
        _
      %v377 = vld [vmem:[%s321] sm:$0xf]
      %v378 = vld [vmem:[%s334] sm:$0xf]
      %v379 = vld [vmem:[%s348] sm:$0xf]
      %v381 = vlaneseq
      %v382 = vshrl.u32 %v381, 7
      %v383 = vsub.s32 0, %v382
      %v384 = vrot.slane %v364, %v383
      %vm386 = vcmask 523264
      %v388 = vsel %vm386, %v377, 0
      %v391 = vsel %vm386, %v378, 0
      %393 = vmatprep.subr.bf16.mxu0 0
      %394 = vmatpush1.bf16.xpose.msra.mxu0 %v391
      %395 = vmatprep.subr.bf16.mxu0 0
      %396 = vmatpush1.bf16.xpose.msra.mxu0 0
      %397 = vmatprep.subr.bf16.mxu0 0
      %398 = vmatpush1.bf16.xpose.msra.mxu0 0
      %399 = vmatprep.subr.bf16.mxu0 0
      %400 = vmatpush1.bf16.xpose.msra.mxu0 0
      %401 = vmatprep.subr.bf16.mxu0 0
      %402 = vmatpush1.bf16.xpose.msra.mxu0 0
      %403 = vmatprep.subr.bf16.mxu0 0
      %404 = vmatpush1.bf16.xpose.msra.mxu0 0
      %405 = vmatprep.subr.bf16.mxu0 0
      %406 = vmatpush1.bf16.xpose.msra.mxu0 0
      %407 = vmatprep.subr.bf16.mxu0 0
      %408 = vmatpush1.bf16.xpose.msra.mxu0 0
      %409 = vmatprep.subr.bf16.mxu0 0
      %410 = vmatpush1.bf16.xpose.msra.mxu0 0
      %411 = vmatprep.subr.bf16.mxu0 0
      %412 = vmatpush1.bf16.xpose.msra.mxu0 0
      %413 = vmatprep.subr.bf16.mxu0 0
      %414 = vmatpush1.bf16.xpose.msra.mxu0 0
      %415 = vmatprep.subr.bf16.mxu0 0
      %416 = vmatpush1.bf16.xpose.msra.mxu0 0
      %417 = vmatprep.subr.bf16.mxu0 0
      %418 = vmatpush1.bf16.xpose.msra.mxu0 0
      %419 = vmatprep.subr.bf16.mxu0 0
      %420 = vmatpush1.bf16.xpose.msra.mxu0 0
      %421 = vmatprep.subr.bf16.mxu0 0
      %422 = vmatpush1.bf16.xpose.msra.mxu0 0
      %423 = vmatprep.subr.bf16.mxu0 0
      %424 = vmatpush1.bf16.xpose.msra.mxu0 0
      %425 = vmatprep.mubr.bf16.mxu0 0
      %426 = vmatmul.mubr.bf16.gmra.mrb[0].mxu0 %v388
      %v427 = vpop.f32.mrb[0].mxu0
      %v428 = vadd.f32 %v384, %v427
      %v429 = vpop.f32.mrb[0].mxu0
      %v430 = vpop.f32.mrb[0].mxu0
      %v431 = vpop.f32.mrb[0].mxu0
      %432 = vdwg.mxu0
      %v433 = vld [vmem:[#allocation2] sm:$0xff]
      %vm434 = vcmask 64512
      %v435 = vsel %vm434, %v428, -inf
      %436 = vmax.xlane.f32.xlu0 %v435
      %v437 = vpop.xlane.xlu0 %436
      %v438 = vmax.f32 %v433, %v437
      %v439 = vsub.f32 %v433, %v438
      %v440 = vmul.f32 %v439, 1.442695
      %v441 = vpow.pop %v440
      %443 = vset.pattern.permute.xlu0 0
      %444 = vperm.xlu0 %443, %v438
      %v445 = vpop.permute.xlu0 %444
      %v447 = vsub.f32 %v428, %v445
      %v448 = vmul.f32 %v447, 1.442695
      %v449 = vpow.pop %v448
      %v450 = vld [vmem:[#allocation3] sm:$0xff]
      %v451 = vmul.f32 %v441, %v450
      %v452 = vsel %vm434, %v449, 0.0
      %453 = vadd.xlane.f32.xlu0 %v452
      %v454 = vpop.xlane.xlu0 %453
      %v455 = vadd.f32 %v451, %v454
      %vm456 = vcmask 7168
      %457 = vst.msk [vmem:[#allocation3] sm:$0xff] %vm456, %v455
      %v458 = vld [vmem:[#allocation4] sm:$0xff]
      %460 = vset.pattern.permute.xlu0 0
      %461 = vperm.xlu0 %460, %v441
      %v462 = vpop.permute.xlu0 %461
      %v464 = vmul.f32 %v462, %v458
      %v465 = vpack.c.bf16 %v449, %v449
      %v467 = vsel %vm434, %v465, 0
      %vm469 = vcmask 1043456
      %v471 = vsel %vm469, %v379, 0
      %473 = vmatprep.subr.bf16.mxu0 0
      %474 = vmatpush1.bf16.msra.mxu0 %v471
      %475 = vmatprep.subr.bf16.mxu0 0
      %476 = vmatpush1.bf16.msra.mxu0 0
      %477 = vmatprep.subr.bf16.mxu0 0
      %478 = vmatpush1.bf16.msra.mxu0 0
      %479 = vmatprep.subr.bf16.mxu0 0
      %480 = vmatpush1.bf16.msra.mxu0 0
      %481 = vmatprep.subr.bf16.mxu0 0
      %482 = vmatpush1.bf16.msra.mxu0 0
      %483 = vmatprep.subr.bf16.mxu0 0
      %484 = vmatpush1.bf16.msra.mxu0 0
      %485 = vmatprep.subr.bf16.mxu0 0
      %486 = vmatpush1.bf16.msra.mxu0 0
      %487 = vmatprep.subr.bf16.mxu0 0
      %488 = vmatpush1.bf16.msra.mxu0 0
      %489 = vmatprep.subr.bf16.mxu0 0
      %490 = vmatpush1.bf16.msra.mxu0 0
      %491 = vmatprep.subr.bf16.mxu0 0
      %492 = vmatpush1.bf16.msra.mxu0 0
      %493 = vmatprep.subr.bf16.mxu0 0
      %494 = vmatpush1.bf16.msra.mxu0 0
      %495 = vmatprep.subr.bf16.mxu0 0
      %496 = vmatpush1.bf16.msra.mxu0 0
      %497 = vmatprep.subr.bf16.mxu0 0
      %498 = vmatpush1.bf16.msra.mxu0 0
      %499 = vmatprep.subr.bf16.mxu0 0
      %500 = vmatpush1.bf16.msra.mxu0 0
      %501 = vmatprep.subr.bf16.mxu0 0
      %502 = vmatpush1.bf16.msra.mxu0 0
      %503 = vmatprep.subr.bf16.mxu0 0
      %504 = vmatpush1.bf16.msra.mxu0 0
      %505 = vmatprep.mubr.bf16.mxu0 0
      %506 = vmatmul.mubr.bf16.gmra.mrb[0].mxu0 %v467
      %v507 = vpop.f32.mrb[0].mxu0
      %v508 = vadd.f32 0.0, %v507
      %v509 = vpop.f32.mrb[0].mxu0
      %v510 = vpop.f32.mrb[0].mxu0
      %v511 = vpop.f32.mrb[0].mxu0
      %512 = vdwg.mxu0
      %v513 = vadd.f32 %v464, %v508
      %514 = vst.msk [vmem:[#allocation4] sm:$0xff] %vm386, %v513
      %515 = vst.msk [vmem:[#allocation2] sm:$0xff] %vm456, %v438
      %v517 = vunpack.c.l.b16 %v377
      %v518 = vpack.c.b16 %v517, %v517
      %519 = vrot.lane.b32.xlu0 %v518, 64
      %v520 = vpop.permute.xlu0 %519
      %v522 = vunpack.c.l.b16 %v378
      %v523 = vpack.c.b16 %v522, %v522
      %524 = vrot.lane.b32.xlu0 %v523, 64
      %v525 = vpop.permute.xlu0 %524
      %v527 = vsel %vm386, %v520, 0
      %v530 = vsel %vm386, %v525, 0
      %532 = vmatprep.subr.bf16.mxu0 0
      %533 = vmatpush1.bf16.xpose.msra.mxu0 %v530
      %534 = vmatprep.subr.bf16.mxu0 0
      %535 = vmatpush1.bf16.xpose.msra.mxu0 0
      %536 = vmatprep.subr.bf16.mxu0 0
      %537 = vmatpush1.bf16.xpose.msra.mxu0 0
      %538 = vmatprep.subr.bf16.mxu0 0
      %539 = vmatpush1.bf16.xpose.msra.mxu0 0
      %540 = vmatprep.subr.bf16.mxu0 0
      %541 = vmatpush1.bf16.xpose.msra.mxu0 0
      %542 = vmatprep.subr.bf16.mxu0 0
      %543 = vmatpush1.bf16.xpose.msra.mxu0 0
      %544 = vmatprep.subr.bf16.mxu0 0
      %545 = vmatpush1.bf16.xpose.msra.mxu0 0
      %546 = vmatprep.subr.bf16.mxu0 0
      %547 = vmatpush1.bf16.xpose.msra.mxu0 0
      %548 = vmatprep.subr.bf16.mxu0 0
      %549 = vmatpush1.bf16.xpose.msra.mxu0 0
      %550 = vmatprep.subr.bf16.mxu0 0
      %551 = vmatpush1.bf16.xpose.msra.mxu0 0
      %552 = vmatprep.subr.bf16.mxu0 0
      %553 = vmatpush1.bf16.xpose.msra.mxu0 0
      %554 = vmatprep.subr.bf16.mxu0 0
      %555 = vmatpush1.bf16.xpose.msra.mxu0 0
      %556 = vmatprep.subr.bf16.mxu0 0
      %557 = vmatpush1.bf16.xpose.msra.mxu0 0
      %558 = vmatprep.subr.bf16.mxu0 0
      %559 = vmatpush1.bf16.xpose.msra.mxu0 0
      %560 = vmatprep.subr.bf16.mxu0 0
      %561 = vmatpush1.bf16.xpose.msra.mxu0 0
      %562 = vmatprep.subr.bf16.mxu0 0
      %563 = vmatpush1.bf16.xpose.msra.mxu0 0
      %564 = vmatprep.mubr.bf16.mxu0 0
      %565 = vmatmul.mubr.bf16.gmra.mrb[0].mxu0 %v527
      %v566 = vpop.f32.mrb[0].mxu0
      %v567 = vadd.f32 %v384, %v566
      %v568 = vpop.f32.mrb[0].mxu0
      %v569 = vpop.f32.mrb[0].mxu0
      %v570 = vpop.f32.mrb[0].mxu0
      %571 = vdwg.mxu0
      %s572 = scalar_lea.vmem [#allocation2], 8
      %v573 = vld [vmem:[%s572] sm:$0xff]
      %v574 = vsel %vm434, %v567, -inf
      %575 = vmax.xlane.f32.xlu0 %v574
      %v576 = vpop.xlane.xlu0 %575
      %v577 = vmax.f32 %v573, %v576
      %v578 = vsub.f32 %v573, %v577
      %v579 = vmul.f32 %v578, 1.442695
      %v580 = vpow.pop %v579
      %582 = vset.pattern.permute.xlu0 0
      %583 = vperm.xlu0 %582, %v577
      %v584 = vpop.permute.xlu0 %583
      %v586 = vsub.f32 %v567, %v584
      %v587 = vmul.f32 %v586, 1.442695
      %v588 = vpow.pop %v587
      %s589 = scalar_lea.vmem [#allocation3], 8
      %v590 = vld [vmem:[%s589] sm:$0xff]
      %v591 = vmul.f32 %v580, %v590
      %v592 = vsel %vm434, %v588, 0.0
      %593 = vadd.xlane.f32.xlu0 %v592
      %v594 = vpop.xlane.xlu0 %593
      %v595 = vadd.f32 %v591, %v594
      %596 = vst.msk [vmem:[%s589] sm:$0xff] %vm456, %v595
      %s597 = scalar_lea.vmem [#allocation4], 8
      %v598 = vld [vmem:[%s597] sm:$0xff]
      %600 = vset.pattern.permute.xlu0 0
      %601 = vperm.xlu0 %600, %v580
      %v602 = vpop.permute.xlu0 %601
      %v604 = vmul.f32 %v602, %v598
      %v605 = vpack.c.bf16 %v588, %v588
      %v607 = vunpack.c.l.b16 %v379
      %v608 = vpack.c.b16 %v607, %v607
      %609 = vrot.lane.b32.xlu0 %v608, 64
      %v610 = vpop.permute.xlu0 %609
      %v612 = vsel %vm434, %v605, 0
      %v615 = vsel %vm469, %v610, 0
      %617 = vmatprep.subr.bf16.mxu0 0
      %618 = vmatpush1.bf16.msra.mxu0 %v615
      %619 = vmatprep.subr.bf16.mxu0 0
      %620 = vmatpush1.bf16.msra.mxu0 0
      %621 = vmatprep.subr.bf16.mxu0 0
      %622 = vmatpush1.bf16.msra.mxu0 0
      %623 = vmatprep.subr.bf16.mxu0 0
      %624 = vmatpush1.bf16.msra.mxu0 0
      %625 = vmatprep.subr.bf16.mxu0 0
      %626 = vmatpush1.bf16.msra.mxu0 0
      %627 = vmatprep.subr.bf16.mxu0 0
      %628 = vmatpush1.bf16.msra.mxu0 0
      %629 = vmatprep.subr.bf16.mxu0 0
      %630 = vmatpush1.bf16.msra.mxu0 0
      %631 = vmatprep.subr.bf16.mxu0 0
      %632 = vmatpush1.bf16.msra.mxu0 0
      %633 = vmatprep.subr.bf16.mxu0 0
      %634 = vmatpush1.bf16.msra.mxu0 0
      %635 = vmatprep.subr.bf16.mxu0 0
      %636 = vmatpush1.bf16.msra.mxu0 0
      %637 = vmatprep.subr.bf16.mxu0 0
      %638 = vmatpush1.bf16.msra.mxu0 0
      %639 = vmatprep.subr.bf16.mxu0 0
      %640 = vmatpush1.bf16.msra.mxu0 0
      %641 = vmatprep.subr.bf16.mxu0 0
      %642 = vmatpush1.bf16.msra.mxu0 0
      %643 = vmatprep.subr.bf16.mxu0 0
      %644 = vmatpush1.bf16.msra.mxu0 0
      %645 = vmatprep.subr.bf16.mxu0 0
      %646 = vmatpush1.bf16.msra.mxu0 0
      %647 = vmatprep.subr.bf16.mxu0 0
      %648 = vmatpush1.bf16.msra.mxu0 0
      %649 = vmatprep.mubr.bf16.mxu0 0
      %650 = vmatmul.mubr.bf16.gmra.mrb[0].mxu0 %v612
      %v651 = vpop.f32.mrb[0].mxu0
      %v652 = vadd.f32 0.0, %v651
      %v653 = vpop.f32.mrb[0].mxu0
      %v654 = vpop.f32.mrb[0].mxu0
      %v655 = vpop.f32.mrb[0].mxu0
      %656 = vdwg.mxu0
      %v657 = vadd.f32 %v604, %v652
      %658 = vst.msk [vmem:[%s597] sm:$0xff] %vm386, %v657
      %659 = vst.msk [vmem:[%s572] sm:$0xff] %vm456, %v577
      // Predicated region
      $region41: #{_forward.11} parent=35 // pred_check
        %p660 = pneg %p365
      $region42: #{_forward.11} parent=35 // pred_check_branch
        %662 = sbr.rel (%p660) target = $region44
      $region43: #{_forward.11} parent=35 // pred_region
        %v663 = vld [vmem:[#allocation3] sm:$0xff]
        %v664 = vrcp.pop %v663
        %v665 = vld [vmem:[#allocation4] sm:$0xff]
        %667 = vset.pattern.permute.xlu0 0
        %668 = vperm.xlu0 %667, %v664
        %v669 = vpop.permute.xlu0 %668
        %v671 = vmul.f32 %v665, %v669
        %v672 = vpack.c.bf16 %v671, %v671
        %v673 = vld [vmem:[%s589] sm:$0xff]
        %v674 = vrcp.pop %v673
        %v675 = vld [vmem:[%s597] sm:$0xff]
        %677 = vset.pattern.permute.xlu0 0
        %678 = vperm.xlu0 %677, %v674
        %v679 = vpop.permute.xlu0 %678
        %v681 = vmul.f32 %v675, %v679
        %v682 = vpack.c.bf16 %v681, %v681
        %684 = vrot.lane.b32.xlu0 %v682, 64
        %v685 = vpop.permute.xlu0 %684
        %v688 = vsel %vm386, %v672, %v685
        %690 = vst [vmem:[%s362] sm:$0xf] %v688
      $region44: #{_forward.11} parent=35 // pred_fallthru
        _
      %p691 = scmp.lt.s32.totalorder %s20, 1
      %s692 = scalar_select %p691, %s20, 1
      %p693 = scmp.lt.s32.totalorder %s21, 0
      %s694 = scalar_select %p693, %s21, 0
      %s695 = sadd.s32 %s694, %s692
      %s696 = smul.addr %s695, 4
      %s697 = scalar_lea.vmem %s4, %s696
      // Predicated region
      $region45: #{_forward.11} parent=35 // pred_check
        %p698 = pneg %p174
      $region46: #{_forward.11} parent=35 // pred_check_branch
        %700 = sbr.rel (%p698) target = $region48
      $region47: #{_forward.11} parent=35 // pred_region
        _
      $region48: #{_forward.11} parent=35 // pred_fallthru
        _
    $region36: #{_forward.11} parent=5 // pred_fallthru
      _
    %p701 = scmp.le.s32.totalorder 2, %s10
    // Predicated region
    $region49: #{_forward.11} parent=5 // pred_check
      %p702 = pneg %p701
    $region50: #{_forward.11} parent=5 // pred_check_branch
      %704 = sbr.rel (%p702) target = $region52
    $region51: #{_forward.11} parent=5 // pred_region
      %s705 = ssub.s32 %s10, 2
      // Predicated region
      $region53: #{_forward.11} parent=51 // pred_check
        %p706 = pneg %p180
      $region54: #{_forward.11} parent=51 // pred_check_branch
        %708 = sbr.rel (%p706) target = $region56
      $region55: #{_forward.11} parent=51 // pred_region
        %p709 = scmp.lt.s32.totalorder %s23, 1
        %s710 = scalar_select %p709, %s23, 1
        %p711 = scmp.lt.s32.totalorder %s24, 0
        %s712 = scalar_select %p711, %s24, 0
        %s713 = sadd.s32 %s712, %s710
        %s714 = smul.addr %s713, 4
        %s715 = scalar_lea.vmem %s4, %s714
      $region56: #{_forward.11} parent=51 // pred_fallthru
        _
    $region52: #{_forward.11} parent=5 // pred_fallthru
      _
  $region6: #{_forward.11} parent=0 // loop_footer
    %s14 = sadd.s32 1, %s10
  $region7: #{_forward.11} parent=0 // loop_footer_branch
    %9 = sbr.rel target = $region3
  $region8: #{_forward.11} parent=0 // loop_exit
    _

// kernel: _forward.13
$region0: #{_forward.13}
  #allocation0 [shape = 'u32[]', space=smem, size = 0x4, offset = 0x4, fixed_abs, tag = 'smem constant byte address 0x4 - core index']
  #allocation1 [shape = 'u32[144,128]{1,0:T(1,128)}', space=vmem, size = 0x12000, scoped, tag = 'internal scratch']
  %s0 = inlined_call_operand.vmem [shape: bf16[16,128], index: 0, kind: input, shape index: {}]
  %s1 = inlined_call_operand.vmem [shape: bf16[128,256], index: 1, kind: input, shape index: {}]
  %s2 = inlined_call_operand.vmem [shape: f32[1,256], index: 2, kind: input, shape index: {}]
  %s3 = inlined_call_operand.vmem [shape: bf16[16,256], index: 3, kind: output, shape index: {}]
  %s4 = sld [smem:[#allocation0]]
  $region22: #{_forward.13} parent=0
    _
  %s6 = ssub.s32 1, %s4
  %s7 = scalar_select 0, %s6, %s4
  // Predicated region
  $region2: #{_forward.13} parent=0 // pred_check
    _
  $region3: #{_forward.13} parent=0 // pred_check_branch
    %9 = sbr.rel (0) target = $region5
  $region4: #{_forward.13} parent=0 // pred_region
    _
  $region5: #{_forward.13} parent=0 // pred_fallthru
    _
  // Predicated region
  $region6: #{_forward.13} parent=0 // pred_check
    _
  $region7: #{_forward.13} parent=0 // pred_check_branch
    %11 = sbr.rel (0) target = $region9
  $region8: #{_forward.13} parent=0 // pred_region
    _
  $region9: #{_forward.13} parent=0 // pred_fallthru
    _
  // Predicated region
  $region10: #{_forward.13} parent=0 // pred_check
    _
  $region11: #{_forward.13} parent=0 // pred_check_branch
    %13 = sbr.rel (0) target = $region13
  $region12: #{_forward.13} parent=0 // pred_region
    _
  $region13: #{_forward.13} parent=0 // pred_fallthru
    _
  %v15 = vld [vmem:[%s0] sm:$0xf]
  %v16 = vld [vmem:[%s0 + $0x4] sm:$0xf]
  %v17 = vld [vmem:[%s1] sm:$0xff]
  %v18 = vld [vmem:[%s1 + $0x8] sm:$0xff]
  %v19 = vld [vmem:[%s1 + $0x10] sm:$0xff]
  %v20 = vld [vmem:[%s1 + $0x18] sm:$0xff]
  %v21 = vld [vmem:[%s1 + $0x20] sm:$0xff]
  %v22 = vld [vmem:[%s1 + $0x28] sm:$0xff]
  %v23 = vld [vmem:[%s1 + $0x30] sm:$0xff]
  %v24 = vld [vmem:[%s1 + $0x38] sm:$0xff]
  %v25 = vld [vmem:[%s1 + $0x40] sm:$0xff]
  %v26 = vld [vmem:[%s1 + $0x48] sm:$0xff]
  %v27 = vld [vmem:[%s1 + $0x50] sm:$0xff]
  %v28 = vld [vmem:[%s1 + $0x58] sm:$0xff]
  %v29 = vld [vmem:[%s1 + $0x60] sm:$0xff]
  %v30 = vld [vmem:[%s1 + $0x68] sm:$0xff]
  %v31 = vld [vmem:[%s1 + $0x70] sm:$0xff]
  %v32 = vld [vmem:[%s1 + $0x78] sm:$0xff]
  %v33 = vld [vmem:[%s2] sm:$0x3]
  %v35 = vlaneseq
  %v36 = vshrl.u32 %v35, 7
  %v37 = vsub.s32 0, %v36
  %v38 = vrot.slane %v33, %v37
  %v39 = vlaneseq
  %v40 = vshrl.u32 %v39, 7
  %v41 = vsub.s32 1, %v40
  %v42 = vrot.slane %v33, %v41
  %v47 = vunpack.c.l.b16 %v15
  %v48 = vunpack.c.l.b16 %v16
  %v49 = vpack.c.b16 %v48, %v47
  %v67 = vunpack.c.l.b16 %v17
  %v68 = vunpack.c.h.b16 %v17
  %v69 = vunpack.c.l.b16 %v18
  %v70 = vunpack.c.h.b16 %v18
  %v71 = vunpack.c.l.b16 %v19
  %v72 = vunpack.c.h.b16 %v19
  %v73 = vunpack.c.l.b16 %v20
  %v74 = vunpack.c.h.b16 %v20
  %v75 = vunpack.c.l.b16 %v21
  %v76 = vunpack.c.h.b16 %v21
  %v77 = vunpack.c.l.b16 %v22
  %v78 = vunpack.c.h.b16 %v22
  %v79 = vunpack.c.l.b16 %v23
  %v80 = vunpack.c.h.b16 %v23
  %v81 = vunpack.c.l.b16 %v24
  %v82 = vunpack.c.h.b16 %v24
  %v83 = vunpack.c.l.b16 %v25
  %v84 = vunpack.c.h.b16 %v25
  %v85 = vunpack.c.l.b16 %v26
  %v86 = vunpack.c.h.b16 %v26
  %v87 = vunpack.c.l.b16 %v27
  %v88 = vunpack.c.h.b16 %v27
  %v89 = vunpack.c.l.b16 %v28
  %v90 = vunpack.c.h.b16 %v28
  %v91 = vunpack.c.l.b16 %v29
  %v92 = vunpack.c.h.b16 %v29
  %v93 = vunpack.c.l.b16 %v30
  %v94 = vunpack.c.h.b16 %v30
  %v95 = vunpack.c.l.b16 %v31
  %v96 = vunpack.c.h.b16 %v31
  %v97 = vunpack.c.l.b16 %v32
  %v98 = vunpack.c.h.b16 %v32
  %v99 = vpack.c.b16 %v69, %v67
  %v100 = vpack.c.b16 %v70, %v68
  %v101 = vpack.c.b16 %v73, %v71
  %v102 = vpack.c.b16 %v74, %v72
  %v103 = vpack.c.b16 %v77, %v75
  %v104 = vpack.c.b16 %v78, %v76
  %v105 = vpack.c.b16 %v81, %v79
  %v106 = vpack.c.b16 %v82, %v80
  %v107 = vpack.c.b16 %v85, %v83
  %v108 = vpack.c.b16 %v86, %v84
  %v109 = vpack.c.b16 %v89, %v87
  %v110 = vpack.c.b16 %v90, %v88
  %v111 = vpack.c.b16 %v93, %v91
  %v112 = vpack.c.b16 %v94, %v92
  %v113 = vpack.c.b16 %v97, %v95
  %v114 = vpack.c.b16 %v98, %v96
  %131 = vmatprep.subr.bf16.mxu0 %v100
  %132 = vmatpush1.bf16.msra.mxu0 %v99
  %133 = vmatprep.subr.bf16.mxu0 %v102
  %134 = vmatpush1.bf16.msra.mxu0 %v101
  %135 = vmatprep.subr.bf16.mxu0 %v104
  %136 = vmatpush1.bf16.msra.mxu0 %v103
  %137 = vmatprep.subr.bf16.mxu0 %v106
  %138 = vmatpush1.bf16.msra.mxu0 %v105
  %139 = vmatprep.subr.bf16.mxu0 %v108
  %140 = vmatpush1.bf16.msra.mxu0 %v107
  %141 = vmatprep.subr.bf16.mxu0 %v110
  %142 = vmatpush1.bf16.msra.mxu0 %v109
  %143 = vmatprep.subr.bf16.mxu0 %v112
  %144 = vmatpush1.bf16.msra.mxu0 %v111
  %145 = vmatprep.subr.bf16.mxu0 %v114
  %146 = vmatpush1.bf16.msra.mxu0 %v113
  %147 = vmatprep.subr.bf16.mxu0 0
  %148 = vmatpush1.bf16.msra.mxu0 0
  %149 = vmatprep.subr.bf16.mxu0 0
  %150 = vmatpush1.bf16.msra.mxu0 0
  %151 = vmatprep.subr.bf16.mxu0 0
  %152 = vmatpush1.bf16.msra.mxu0 0
  %153 = vmatprep.subr.bf16.mxu0 0
  %154 = vmatpush1.bf16.msra.mxu0 0
  %155 = vmatprep.subr.bf16.mxu0 0
  %156 = vmatpush1.bf16.msra.mxu0 0
  %157 = vmatprep.subr.bf16.mxu0 0
  %158 = vmatpush1.bf16.msra.mxu0 0
  %159 = vmatprep.subr.bf16.mxu0 0
  %160 = vmatpush1.bf16.msra.mxu0 0
  %161 = vmatprep.subr.bf16.mxu0 0
  %162 = vmatpush1.bf16.msra.mxu0 0
  %163 = vmatprep.mubr.bf16.mxu0 0
  %164 = vmatmul.mubr.bf16.gmra.mrb[0].mxu0 %v49
  %v165 = vpop.f32.mrb[0].mxu0
  %v166 = vadd.f32 %v38, %v165
  %v167 = vpop.f32.mrb[0].mxu0
  %v168 = vadd.f32 %v42, %v167
  %v169 = vpop.f32.mrb[0].mxu0
  %v170 = vadd.f32 %v38, %v169
  %v171 = vpop.f32.mrb[0].mxu0
  %v172 = vadd.f32 %v42, %v171
  %173 = vdwg.mxu0
  %v174 = vmul.f32 %v166, 0.5
  %v175 = vmul.f32 %v168, 0.5
  %v176 = vmul.f32 %v170, 0.5
  %v177 = vmul.f32 %v172, 0.5
  %v178 = vmul.f32 %v166, 0.70710677
  %v179 = vmul.f32 %v168, 0.70710677
  %v180 = vmul.f32 %v170, 0.70710677
  %v181 = vmul.f32 %v172, 0.70710677
  %v182 = vand.u32 2147483647, %v178
  %v183 = vand.u32 2147483647, %v179
  %v184 = vand.u32 2147483647, %v180
  %v185 = vand.u32 2147483647, %v181
  %v186 = vmul.f32 %v182, 0.3275911
  %v187 = vmul.f32 %v183, 0.3275911
  %v188 = vmul.f32 %v184, 0.3275911
  %v189 = vmul.f32 %v185, 0.3275911
  %v190 = vadd.f32 %v186, 1.0
  %v191 = vadd.f32 %v187, 1.0
  %v192 = vadd.f32 %v188, 1.0
  %v193 = vadd.f32 %v189, 1.0
  %v194 = vrcp.pop %v190
  %v195 = vmul.f32 1.0, %v194
  %v196 = vrcp.pop %v191
  %v197 = vmul.f32 1.0, %v196
  %v198 = vrcp.pop %v192
  %v199 = vmul.f32 1.0, %v198
  %v200 = vrcp.pop %v193
  %v201 = vmul.f32 1.0, %v200
  %v202 = vmul.f32 %v195, 1.0614054
  %v203 = vmul.f32 %v197, 1.0614054
  %v204 = vmul.f32 %v199, 1.0614054
  %v205 = vmul.f32 %v201, 1.0614054
  %v206 = vadd.f32 %v202, -1.4531521
  %v207 = vadd.f32 %v203, -1.4531521
  %v208 = vadd.f32 %v204, -1.4531521
  %v209 = vadd.f32 %v205, -1.4531521
  %v210 = vmul.f32 %v206, %v195
  %v211 = vmul.f32 %v207, %v197
  %v212 = vmul.f32 %v208, %v199
  %v213 = vmul.f32 %v209, %v201
  %v214 = vadd.f32 %v210, 1.4214138
  %v215 = vadd.f32 %v211, 1.4214138
  %v216 = vadd.f32 %v212, 1.4214138
  %v217 = vadd.f32 %v213, 1.4214138
  %v218 = vmul.f32 %v214, %v195
  %v219 = vmul.f32 %v215, %v197
  %v220 = vmul.f32 %v216, %v199
  %v221 = vmul.f32 %v217, %v201
  %v222 = vadd.f32 %v218, -0.28449672
  %v223 = vadd.f32 %v219, -0.28449672
  %v224 = vadd.f32 %v220, -0.28449672
  %v225 = vadd.f32 %v221, -0.28449672
  %v226 = vmul.f32 %v222, %v195
  %v227 = vmul.f32 %v223, %v197
  %v228 = vmul.f32 %v224, %v199
  %v229 = vmul.f32 %v225, %v201
  %v230 = vadd.f32 %v226, 0.2548296
  %v231 = vadd.f32 %v227, 0.2548296
  %v232 = vadd.f32 %v228, 0.2548296
  %v233 = vadd.f32 %v229, 0.2548296
  %v234 = vmul.f32 %v230, %v195
  %v235 = vmul.f32 %v231, %v197
  %v236 = vmul.f32 %v232, %v199
  %v237 = vmul.f32 %v233, %v201
  %v238 = vsub.f32 0.0, %v182
  %v239 = vsub.f32 0.0, %v183
  %v240 = vsub.f32 0.0, %v184
  %v241 = vsub.f32 0.0, %v185
  %v242 = vmul.f32 %v238, %v182
  %v243 = vmul.f32 %v239, %v183
  %v244 = vmul.f32 %v240, %v184
  %v245 = vmul.f32 %v241, %v185
  %v246 = vmul.f32 %v242, 1.442695
  %v247 = vpow.pop %v246
  %v248 = vmul.f32 %v243, 1.442695
  %v249 = vpow.pop %v248
  %v250 = vmul.f32 %v244, 1.442695
  %v251 = vpow.pop %v250
  %v252 = vmul.f32 %v245, 1.442695
  %v253 = vpow.pop %v252
  %v254 = vmul.f32 %v234, %v247
  %v255 = vmul.f32 %v235, %v249
  %v256 = vmul.f32 %v236, %v251
  %v257 = vmul.f32 %v237, %v253
  %v258 = vsub.f32 1.0, %v254
  %v259 = vsub.f32 1.0, %v255
  %v260 = vsub.f32 1.0, %v256
  %v261 = vsub.f32 1.0, %v257
  %vm262 = vcmp.lt.f32.partialorder %v178, 0.0
  %vm263 = vcmp.lt.f32.partialorder %v179, 0.0
  %vm264 = vcmp.lt.f32.partialorder %v180, 0.0
  %vm265 = vcmp.lt.f32.partialorder %v181, 0.0
  %v266 = vsub.f32 0.0, %v258
  %v267 = vsub.f32 0.0, %v259
  %v268 = vsub.f32 0.0, %v260
  %v269 = vsub.f32 0.0, %v261
  %v270 = vsel %vm262, %v266, %v258
  %v271 = vsel %vm263, %v267, %v259
  %v272 = vsel %vm264, %v268, %v260
  %v273 = vsel %vm265, %v269, %v261
  %v274 = vadd.f32 %v270, 1.0
  %v275 = vadd.f32 %v271, 1.0
  %v276 = vadd.f32 %v272, 1.0
  %v277 = vadd.f32 %v273, 1.0
  %v278 = vmul.f32 %v174, %v274
  %v279 = vmul.f32 %v175, %v275
  %v280 = vmul.f32 %v176, %v276
  %v281 = vmul.f32 %v177, %v277
  %v282 = vpack.c.bf16 %v280, %v278
  %v283 = vpack.c.bf16 %v281, %v279
  %v286 = vunpack.c.l.b16 %v282
  %v287 = vunpack.c.l.b16 %v283
  %v288 = vunpack.c.h.b16 %v282
  %v289 = vunpack.c.h.b16 %v283
  %v290 = vpack.c.b16 %v287, %v286
  %v291 = vpack.c.b16 %v289, %v288
  %294 = vst [vmem:[%s3] sm:$0xff] %v290
  %295 = vst [vmem:[%s3 + $0x8] sm:$0xff] %v291
  // Predicated region
  $region14: #{_forward.13} parent=0 // pred_check
    _
  $region15: #{_forward.13} parent=0 // pred_check_branch
    %297 = sbr.rel (0) target = $region17
  $region16: #{_forward.13} parent=0 // pred_region
    _
  $region17: #{_forward.13} parent=0 // pred_fallthru
    _
  // Predicated region
  $region18: #{_forward.13} parent=0 // pred_check
    _
  $region19: #{_forward.13} parent=0 // pred_check_branch
    %299 = sbr.rel (0) target = $region21
  $region20: #{_forward.13} parent=0 // pred_region
    _
  $region21: #{_forward.13} parent=0 // pred_fallthru
    _

// kernel: _forward.14
$region0: #{_forward.14}
  #allocation0 [shape = 'u32[]', space=smem, size = 0x4, offset = 0x4, fixed_abs, tag = 'smem constant byte address 0x4 - core index']
  #allocation1 [shape = 'u32[144,128]{1,0:T(1,128)}', space=vmem, size = 0x12000, scoped, tag = 'internal scratch']
  %s0 = inlined_call_operand.vmem [shape: bf16[16,256], index: 0, kind: input, shape index: {}]
  %s1 = inlined_call_operand.vmem [shape: bf16[256,128], index: 1, kind: input, shape index: {}]
  %s2 = inlined_call_operand.vmem [shape: f32[1,128], index: 2, kind: input, shape index: {}]
  %s3 = inlined_call_operand.vmem [shape: bf16[16,128], index: 3, kind: input, shape index: {}]
  %s4 = inlined_call_operand.vmem [shape: f32[1,128], index: 4, kind: input, shape index: {}]
  %s5 = inlined_call_operand.vmem [shape: f32[1,128], index: 5, kind: input, shape index: {}]
  %s6 = inlined_call_operand.vmem [shape: bf16[16,128], index: 6, kind: output, shape index: {}]
  %s7 = sld [smem:[#allocation0]]
  $region34: #{_forward.14} parent=0
    _
  %s9 = ssub.s32 1, %s7
  %s10 = scalar_select 0, %s9, %s7
  // Predicated region
  $region2: #{_forward.14} parent=0 // pred_check
    _
  $region3: #{_forward.14} parent=0 // pred_check_branch
    %12 = sbr.rel (0) target = $region5
  $region4: #{_forward.14} parent=0 // pred_region
    _
  $region5: #{_forward.14} parent=0 // pred_fallthru
    _
  // Predicated region
  $region6: #{_forward.14} parent=0 // pred_check
    _
  $region7: #{_forward.14} parent=0 // pred_check_branch
    %14 = sbr.rel (0) target = $region9
  $region8: #{_forward.14} parent=0 // pred_region
    _
  $region9: #{_forward.14} parent=0 // pred_fallthru
    _
  // Predicated region
  $region10: #{_forward.14} parent=0 // pred_check
    _
  $region11: #{_forward.14} parent=0 // pred_check_branch
    %16 = sbr.rel (0) target = $region13
  $region12: #{_forward.14} parent=0 // pred_region
    _
  $region13: #{_forward.14} parent=0 // pred_fallthru
    _
  // Predicated region
  $region14: #{_forward.14} parent=0 // pred_check
    _
  $region15: #{_forward.14} parent=0 // pred_check_branch
    %18 = sbr.rel (0) target = $region17
  $region16: #{_forward.14} parent=0 // pred_region
    _
  $region17: #{_forward.14} parent=0 // pred_fallthru
    _
  // Predicated region
  $region18: #{_forward.14} parent=0 // pred_check
    _
  $region19: #{_forward.14} parent=0 // pred_check_branch
    %20 = sbr.rel (0) target = $region21
  $region20: #{_forward.14} parent=0 // pred_region
    _
  $region21: #{_forward.14} parent=0 // pred_fallthru
    _
  // Predicated region
  $region22: #{_forward.14} parent=0 // pred_check
    _
  $region23: #{_forward.14} parent=0 // pred_check_branch
    %22 = sbr.rel (0) target = $region25
  $region24: #{_forward.14} parent=0 // pred_region
    _
  $region25: #{_forward.14} parent=0 // pred_fallthru
    _
  %v24 = vld [vmem:[%s0] sm:$0xff]
  %v25 = vld [vmem:[%s0 + $0x8] sm:$0xff]
  %v26 = vld [vmem:[%s1] sm:$0xf]
  %v27 = vld [vmem:[%s1 + $0x4] sm:$0xf]
  %v28 = vld [vmem:[%s1 + $0x8] sm:$0xf]
  %v29 = vld [vmem:[%s1 + $0xc] sm:$0xf]
  %v30 = vld [vmem:[%s1 + $0x10] sm:$0xf]
  %v31 = vld [vmem:[%s1 + $0x14] sm:$0xf]
  %v32 = vld [vmem:[%s1 + $0x18] sm:$0xf]
  %v33 = vld [vmem:[%s1 + $0x1c] sm:$0xf]
  %v34 = vld [vmem:[%s1 + $0x20] sm:$0xf]
  %v35 = vld [vmem:[%s1 + $0x24] sm:$0xf]
  %v36 = vld [vmem:[%s1 + $0x28] sm:$0xf]
  %v37 = vld [vmem:[%s1 + $0x2c] sm:$0xf]
  %v38 = vld [vmem:[%s1 + $0x30] sm:$0xf]
  %v39 = vld [vmem:[%s1 + $0x34] sm:$0xf]
  %v40 = vld [vmem:[%s1 + $0x38] sm:$0xf]
  %v41 = vld [vmem:[%s1 + $0x3c] sm:$0xf]
  %v42 = vld [vmem:[%s1 + $0x40] sm:$0xf]
  %v43 = vld [vmem:[%s1 + $0x44] sm:$0xf]
  %v44 = vld [vmem:[%s1 + $0x48] sm:$0xf]
  %v45 = vld [vmem:[%s1 + $0x4c] sm:$0xf]
  %v46 = vld [vmem:[%s1 + $0x50] sm:$0xf]
  %v47 = vld [vmem:[%s1 + $0x54] sm:$0xf]
  %v48 = vld [vmem:[%s1 + $0x58] sm:$0xf]
  %v49 = vld [vmem:[%s1 + $0x5c] sm:$0xf]
  %v50 = vld [vmem:[%s1 + $0x60] sm:$0xf]
  %v51 = vld [vmem:[%s1 + $0x64] sm:$0xf]
  %v52 = vld [vmem:[%s1 + $0x68] sm:$0xf]
  %v53 = vld [vmem:[%s1 + $0x6c] sm:$0xf]
  %v54 = vld [vmem:[%s1 + $0x70] sm:$0xf]
  %v55 = vld [vmem:[%s1 + $0x74] sm:$0xf]
  %v56 = vld [vmem:[%s1 + $0x78] sm:$0xf]
  %v57 = vld [vmem:[%s1 + $0x7c] sm:$0xf]
  %v58 = vld [vmem:[%s2] sm:$0x1]
  %v60 = vlaneseq
  %v61 = vshrl.u32 %v60, 7
  %v62 = vsub.s32 0, %v61
  %v63 = vrot.slane %v58, %v62
  %v67 = vunpack.c.l.b16 %v24
  %v68 = vunpack.c.h.b16 %v24
  %v69 = vunpack.c.l.b16 %v25
  %v70 = vunpack.c.h.b16 %v25
  %v71 = vpack.c.b16 %v69, %v67
  %v72 = vpack.c.b16 %v70, %v68
  %v107 = vunpack.c.l.b16 %v26
  %v108 = vunpack.c.l.b16 %v27
  %v109 = vunpack.c.l.b16 %v28
  %v110 = vunpack.c.l.b16 %v29
  %v111 = vunpack.c.l.b16 %v30
  %v112 = vunpack.c.l.b16 %v31
  %v113 = vunpack.c.l.b16 %v32
  %v114 = vunpack.c.l.b16 %v33
  %v115 = vunpack.c.l.b16 %v34
  %v116 = vunpack.c.l.b16 %v35
  %v117 = vunpack.c.l.b16 %v36
  %v118 = vunpack.c.l.b16 %v37
  %v119 = vunpack.c.l.b16 %v38
  %v120 = vunpack.c.l.b16 %v39
  %v121 = vunpack.c.l.b16 %v40
  %v122 = vunpack.c.l.b16 %v41
  %v123 = vunpack.c.l.b16 %v42
  %v124 = vunpack.c.l.b16 %v43
  %v125 = vunpack.c.l.b16 %v44
  %v126 = vunpack.c.l.b16 %v45
  %v127 = vunpack.c.l.b16 %v46
  %v128 = vunpack.c.l.b16 %v47
  %v129 = vunpack.c.l.b16 %v48
  %v130 = vunpack.c.l.b16 %v49
  %v131 = vunpack.c.l.b16 %v50
  %v132 = vunpack.c.l.b16 %v51
  %v133 = vunpack.c.l.b16 %v52
  %v134 = vunpack.c.l.b16 %v53
  %v135 = vunpack.c.l.b16 %v54
  %v136 = vunpack.c.l.b16 %v55
  %v137 = vunpack.c.l.b16 %v56
  %v138 = vunpack.c.l.b16 %v57
  %v139 = vpack.c.b16 %v108, %v107
  %v140 = vpack.c.b16 %v110, %v109
  %v141 = vpack.c.b16 %v112, %v111
  %v142 = vpack.c.b16 %v114, %v113
  %v143 = vpack.c.b16 %v116, %v115
  %v144 = vpack.c.b16 %v118, %v117
  %v145 = vpack.c.b16 %v120, %v119
  %v146 = vpack.c.b16 %v122, %v121
  %v147 = vpack.c.b16 %v124, %v123
  %v148 = vpack.c.b16 %v126, %v125
  %v149 = vpack.c.b16 %v128, %v127
  %v150 = vpack.c.b16 %v130, %v129
  %v151 = vpack.c.b16 %v132, %v131
  %v152 = vpack.c.b16 %v134, %v133
  %v153 = vpack.c.b16 %v136, %v135
  %v154 = vpack.c.b16 %v138, %v137
  %171 = vmatprep.subr.bf16.mxu0 0
  %172 = vmatpush1.bf16.msra.mxu0 %v139
  %173 = vmatprep.subr.bf16.mxu0 0
  %174 = vmatpush1.bf16.msra.mxu0 %v140
  %175 = vmatprep.subr.bf16.mxu0 0
  %176 = vmatpush1.bf16.msra.mxu0 %v141
  %177 = vmatprep.subr.bf16.mxu0 0
  %178 = vmatpush1.bf16.msra.mxu0 %v142
  %179 = vmatprep.subr.bf16.mxu0 0
  %180 = vmatpush1.bf16.msra.mxu0 %v143
  %181 = vmatprep.subr.bf16.mxu0 0
  %182 = vmatpush1.bf16.msra.mxu0 %v144
  %183 = vmatprep.subr.bf16.mxu0 0
  %184 = vmatpush1.bf16.msra.mxu0 %v145
  %185 = vmatprep.subr.bf16.mxu0 0
  %186 = vmatpush1.bf16.msra.mxu0 %v146
  %187 = vmatprep.subr.bf16.mxu0 0
  %188 = vmatpush1.bf16.msra.mxu0 %v147
  %189 = vmatprep.subr.bf16.mxu0 0
  %190 = vmatpush1.bf16.msra.mxu0 %v148
  %191 = vmatprep.subr.bf16.mxu0 0
  %192 = vmatpush1.bf16.msra.mxu0 %v149
  %193 = vmatprep.subr.bf16.mxu0 0
  %194 = vmatpush1.bf16.msra.mxu0 %v150
  %195 = vmatprep.subr.bf16.mxu0 0
  %196 = vmatpush1.bf16.msra.mxu0 %v151
  %197 = vmatprep.subr.bf16.mxu0 0
  %198 = vmatpush1.bf16.msra.mxu0 %v152
  %199 = vmatprep.subr.bf16.mxu0 0
  %200 = vmatpush1.bf16.msra.mxu0 %v153
  %201 = vmatprep.subr.bf16.mxu0 0
  %202 = vmatpush1.bf16.msra.mxu0 %v154
  %203 = vmatprep.mubr.bf16.mxu0 %v72
  %204 = vmatmul.mubr.bf16.gmra.mrb[0].mxu0 %v71
  %v205 = vpop.f32.mrb[0].mxu0
  %v206 = vadd.f32 %v63, %v205
  %v207 = vpop.f32.mrb[0].mxu0
  %v208 = vpop.f32.mrb[0].mxu0
  %v209 = vadd.f32 %v63, %v208
  %v210 = vpop.f32.mrb[0].mxu0
  %211 = vdwg.mxu0
  %v212 = vld [vmem:[%s3] sm:$0xf]
  %v213 = vld [vmem:[%s3 + $0x4] sm:$0xf]
  %v214 = vunpack.c.l.bf16 %v212
  %v215 = vunpack.c.l.bf16 %v213
  %v216 = vadd.f32 %v206, %v214
  %v217 = vadd.f32 %v209, %v215
  %218 = vadd.xlane.f32.xlu0 %v216
  %v219 = vpop.xlane.xlu0 %218
  %220 = vadd.xlane.f32.xlu0 %v217
  %v221 = vpop.xlane.xlu0 %220
  %v222 = vrcp.pop 128.0
  %v223 = vmul.f32 %v219, %v222
  %v224 = vmul.f32 %v221, %v222
  %v225 = vsub.f32 %v216, %v223
  %v226 = vsub.f32 %v217, %v224
  %v227 = vmul.f32 %v225, %v225
  %v228 = vmul.f32 %v226, %v226
  %229 = vadd.xlane.f32.xlu0 %v227
  %v230 = vpop.xlane.xlu0 %229
  %231 = vadd.xlane.f32.xlu0 %v228
  %v232 = vpop.xlane.xlu0 %231
  %v233 = vmul.f32 %v230, %v222
  %v234 = vmul.f32 %v232, %v222
  %v235 = vadd.f32 %v233, 1e-12
  %v236 = vadd.f32 %v234, 1e-12
  %v237 = vrsqrt.pop %v235
  %v238 = vrsqrt.pop %v236
  %v239 = vmul.f32 %v225, %v237
  %v240 = vmul.f32 %v226, %v238
  %v241 = vld [vmem:[%s4] sm:$0x1]
  %v243 = vlaneseq
  %v244 = vshrl.u32 %v243, 7
  %v245 = vsub.s32 0, %v244
  %v246 = vrot.slane %v241, %v245
  %v248 = vmul.f32 %v239, %v246
  %v249 = vmul.f32 %v240, %v246
  %v250 = vld [vmem:[%s5] sm:$0x1]
  %v252 = vlaneseq
  %v253 = vshrl.u32 %v252, 7
  %v254 = vsub.s32 0, %v253
  %v255 = vrot.slane %v250, %v254
  %v257 = vadd.f32 %v248, %v255
  %v258 = vadd.f32 %v249, %v255
  %v259 = vpack.c.bf16 %v258, %v257
  %v261 = vunpack.c.l.b16 %v259
  %v262 = vunpack.c.h.b16 %v259
  %v263 = vpack.c.b16 %v261, %v261
  %v264 = vpack.c.b16 %v262, %v262
  %267 = vst [vmem:[%s6] sm:$0xf] %v263
  %268 = vst [vmem:[%s6 + $0x4] sm:$0xf] %v264
  // Predicated region
  $region26: #{_forward.14} parent=0 // pred_check
    _
  $region27: #{_forward.14} parent=0 // pred_check_branch
    %270 = sbr.rel (0) target = $region29
  $region28: #{_forward.14} parent=0 // pred_region
    _
  $region29: #{_forward.14} parent=0 // pred_fallthru
    _
  // Predicated region
  $region30: #{_forward.14} parent=0 // pred_check
    _
  $region31: #{_forward.14} parent=0 // pred_check_branch
    %272 = sbr.rel (0) target = $region33
  $region32: #{_forward.14} parent=0 // pred_region
    _
  $region33: #{_forward.14} parent=0 // pred_fallthru
    _

// kernel: _forward.19
$region0: #{_forward.19}
  #allocation0 [shape = 'u32[]', space=smem, size = 0x4, offset = 0x4, fixed_abs, tag = 'smem constant byte address 0x4 - core index']
  #allocation1 [shape = 'u32[144,128]{1,0:T(1,128)}', space=vmem, size = 0x12000, scoped, tag = 'internal scratch']
  %s0 = inlined_call_operand.vmem [shape: bf16[16,256], index: 0, kind: input, shape index: {}]
  %s1 = inlined_call_operand.vmem [shape: bf16[256,128], index: 1, kind: input, shape index: {}]
  %s2 = inlined_call_operand.vmem [shape: f32[1,128], index: 2, kind: input, shape index: {}]
  %s3 = inlined_call_operand.vmem [shape: bf16[16,128], index: 3, kind: input, shape index: {}]
  %s4 = inlined_call_operand.vmem [shape: f32[1,128], index: 4, kind: input, shape index: {}]
  %s5 = inlined_call_operand.vmem [shape: f32[1,128], index: 5, kind: input, shape index: {}]
  %s6 = inlined_call_operand.hbm [shape: bf16[16,128], index: 6, kind: output, shape index: {}]
  %s7 = sld [smem:[#allocation0]]
  $region34: #{_forward.19} parent=0
    _
  %s9 = ssub.s32 1, %s7
  %s10 = scalar_select 0, %s9, %s7
  $region1: #{_forward.19} parent=0
    #allocation2 [shape = 'u8[4096]{0}', space=vmem, size = 0x1000, scoped, tag = 'output window, operand 0, single buffered']
    #allocation3 [shape = 's32[1]{0}', space=sflag, size = 0x4, scoped, tag = 'scoped memory for _forward.19']
    %11 = vsyncpa [#allocation3], 0
    // Predicated region
    $region2: #{_forward.19} parent=1 // pred_check
      _
    $region3: #{_forward.19} parent=1 // pred_check_branch
      %13 = sbr.rel (0) target = $region5
    $region4: #{_forward.19} parent=1 // pred_region
      _
    $region5: #{_forward.19} parent=1 // pred_fallthru
      _
    // Predicated region
    $region6: #{_forward.19} parent=1 // pred_check
      _
    $region7: #{_forward.19} parent=1 // pred_check_branch
      %15 = sbr.rel (0) target = $region9
    $region8: #{_forward.19} parent=1 // pred_region
      _
    $region9: #{_forward.19} parent=1 // pred_fallthru
      _
    // Predicated region
    $region10: #{_forward.19} parent=1 // pred_check
      _
    $region11: #{_forward.19} parent=1 // pred_check_branch
      %17 = sbr.rel (0) target = $region13
    $region12: #{_forward.19} parent=1 // pred_region
      _
    $region13: #{_forward.19} parent=1 // pred_fallthru
      _
    // Predicated region
    $region14: #{_forward.19} parent=1 // pred_check
      _
    $region15: #{_forward.19} parent=1 // pred_check_branch
      %19 = sbr.rel (0) target = $region17
    $region16: #{_forward.19} parent=1 // pred_region
      _
    $region17: #{_forward.19} parent=1 // pred_fallthru
      _
    // Predicated region
    $region18: #{_forward.19} parent=1 // pred_check
      _
    $region19: #{_forward.19} parent=1 // pred_check_branch
      %21 = sbr.rel (0) target = $region21
    $region20: #{_forward.19} parent=1 // pred_region
      _
    $region21: #{_forward.19} parent=1 // pred_fallthru
      _
    // Predicated region
    $region22: #{_forward.19} parent=1 // pred_check
      _
    $region23: #{_forward.19} parent=1 // pred_check_branch
      %23 = sbr.rel (0) target = $region25
    $region24: #{_forward.19} parent=1 // pred_region
      _
    $region25: #{_forward.19} parent=1 // pred_fallthru
      _
    %v25 = vld [vmem:[%s0] sm:$0xff]
    %v26 = vld [vmem:[%s0 + $0x8] sm:$0xff]
    %v27 = vld [vmem:[%s1] sm:$0xf]
    %v28 = vld [vmem:[%s1 + $0x4] sm:$0xf]
    %v29 = vld [vmem:[%s1 + $0x8] sm:$0xf]
    %v30 = vld [vmem:[%s1 + $0xc] sm:$0xf]
    %v31 = vld [vmem:[%s1 + $0x10] sm:$0xf]
    %v32 = vld [vmem:[%s1 + $0x14] sm:$0xf]
    %v33 = vld [vmem:[%s1 + $0x18] sm:$0xf]
    %v34 = vld [vmem:[%s1 + $0x1c] sm:$0xf]
    %v35 = vld [vmem:[%s1 + $0x20] sm:$0xf]
    %v36 = vld [vmem:[%s1 + $0x24] sm:$0xf]
    %v37 = vld [vmem:[%s1 + $0x28] sm:$0xf]
    %v38 = vld [vmem:[%s1 + $0x2c] sm:$0xf]
    %v39 = vld [vmem:[%s1 + $0x30] sm:$0xf]
    %v40 = vld [vmem:[%s1 + $0x34] sm:$0xf]
    %v41 = vld [vmem:[%s1 + $0x38] sm:$0xf]
    %v42 = vld [vmem:[%s1 + $0x3c] sm:$0xf]
    %v43 = vld [vmem:[%s1 + $0x40] sm:$0xf]
    %v44 = vld [vmem:[%s1 + $0x44] sm:$0xf]
    %v45 = vld [vmem:[%s1 + $0x48] sm:$0xf]
    %v46 = vld [vmem:[%s1 + $0x4c] sm:$0xf]
    %v47 = vld [vmem:[%s1 + $0x50] sm:$0xf]
    %v48 = vld [vmem:[%s1 + $0x54] sm:$0xf]
    %v49 = vld [vmem:[%s1 + $0x58] sm:$0xf]
    %v50 = vld [vmem:[%s1 + $0x5c] sm:$0xf]
    %v51 = vld [vmem:[%s1 + $0x60] sm:$0xf]
    %v52 = vld [vmem:[%s1 + $0x64] sm:$0xf]
    %v53 = vld [vmem:[%s1 + $0x68] sm:$0xf]
    %v54 = vld [vmem:[%s1 + $0x6c] sm:$0xf]
    %v55 = vld [vmem:[%s1 + $0x70] sm:$0xf]
    %v56 = vld [vmem:[%s1 + $0x74] sm:$0xf]
    %v57 = vld [vmem:[%s1 + $0x78] sm:$0xf]
    %v58 = vld [vmem:[%s1 + $0x7c] sm:$0xf]
    %v59 = vld [vmem:[%s2] sm:$0x1]
    %v61 = vlaneseq
    %v62 = vshrl.u32 %v61, 7
    %v63 = vsub.s32 0, %v62
    %v64 = vrot.slane %v59, %v63
    %v68 = vunpack.c.l.b16 %v25
    %v69 = vunpack.c.h.b16 %v25
    %v70 = vunpack.c.l.b16 %v26
    %v71 = vunpack.c.h.b16 %v26
    %v72 = vpack.c.b16 %v70, %v68
    %v73 = vpack.c.b16 %v71, %v69
    %v108 = vunpack.c.l.b16 %v27
    %v109 = vunpack.c.l.b16 %v28
    %v110 = vunpack.c.l.b16 %v29
    %v111 = vunpack.c.l.b16 %v30
    %v112 = vunpack.c.l.b16 %v31
    %v113 = vunpack.c.l.b16 %v32
    %v114 = vunpack.c.l.b16 %v33
    %v115 = vunpack.c.l.b16 %v34
    %v116 = vunpack.c.l.b16 %v35
    %v117 = vunpack.c.l.b16 %v36
    %v118 = vunpack.c.l.b16 %v37
    %v119 = vunpack.c.l.b16 %v38
    %v120 = vunpack.c.l.b16 %v39
    %v121 = vunpack.c.l.b16 %v40
    %v122 = vunpack.c.l.b16 %v41
    %v123 = vunpack.c.l.b16 %v42
    %v124 = vunpack.c.l.b16 %v43
    %v125 = vunpack.c.l.b16 %v44
    %v126 = vunpack.c.l.b16 %v45
    %v127 = vunpack.c.l.b16 %v46
    %v128 = vunpack.c.l.b16 %v47
    %v129 = vunpack.c.l.b16 %v48
    %v130 = vunpack.c.l.b16 %v49
    %v131 = vunpack.c.l.b16 %v50
    %v132 = vunpack.c.l.b16 %v51
    %v133 = vunpack.c.l.b16 %v52
    %v134 = vunpack.c.l.b16 %v53
    %v135 = vunpack.c.l.b16 %v54
    %v136 = vunpack.c.l.b16 %v55
    %v137 = vunpack.c.l.b16 %v56
    %v138 = vunpack.c.l.b16 %v57
    %v139 = vunpack.c.l.b16 %v58
    %v140 = vpack.c.b16 %v109, %v108
    %v141 = vpack.c.b16 %v111, %v110
    %v142 = vpack.c.b16 %v113, %v112
    %v143 = vpack.c.b16 %v115, %v114
    %v144 = vpack.c.b16 %v117, %v116
    %v145 = vpack.c.b16 %v119, %v118
    %v146 = vpack.c.b16 %v121, %v120
    %v147 = vpack.c.b16 %v123, %v122
    %v148 = vpack.c.b16 %v125, %v124
    %v149 = vpack.c.b16 %v127, %v126
    %v150 = vpack.c.b16 %v129, %v128
    %v151 = vpack.c.b16 %v131, %v130
    %v152 = vpack.c.b16 %v133, %v132
    %v153 = vpack.c.b16 %v135, %v134
    %v154 = vpack.c.b16 %v137, %v136
    %v155 = vpack.c.b16 %v139, %v138
    %172 = vmatprep.subr.bf16.mxu0 0
    %173 = vmatpush1.bf16.msra.mxu0 %v140
    %174 = vmatprep.subr.bf16.mxu0 0
    %175 = vmatpush1.bf16.msra.mxu0 %v141
    %176 = vmatprep.subr.bf16.mxu0 0
    %177 = vmatpush1.bf16.msra.mxu0 %v142
    %178 = vmatprep.subr.bf16.mxu0 0
    %179 = vmatpush1.bf16.msra.mxu0 %v143
    %180 = vmatprep.subr.bf16.mxu0 0
    %181 = vmatpush1.bf16.msra.mxu0 %v144
    %182 = vmatprep.subr.bf16.mxu0 0
    %183 = vmatpush1.bf16.msra.mxu0 %v145
    %184 = vmatprep.subr.bf16.mxu0 0
    %185 = vmatpush1.bf16.msra.mxu0 %v146
    %186 = vmatprep.subr.bf16.mxu0 0
    %187 = vmatpush1.bf16.msra.mxu0 %v147
    %188 = vmatprep.subr.bf16.mxu0 0
    %189 = vmatpush1.bf16.msra.mxu0 %v148
    %190 = vmatprep.subr.bf16.mxu0 0
    %191 = vmatpush1.bf16.msra.mxu0 %v149
    %192 = vmatprep.subr.bf16.mxu0 0
    %193 = vmatpush1.bf16.msra.mxu0 %v150
    %194 = vmatprep.subr.bf16.mxu0 0
    %195 = vmatpush1.bf16.msra.mxu0 %v151
    %196 = vmatprep.subr.bf16.mxu0 0
    %197 = vmatpush1.bf16.msra.mxu0 %v152
    %198 = vmatprep.subr.bf16.mxu0 0
    %199 = vmatpush1.bf16.msra.mxu0 %v153
    %200 = vmatprep.subr.bf16.mxu0 0
    %201 = vmatpush1.bf16.msra.mxu0 %v154
    %202 = vmatprep.subr.bf16.mxu0 0
    %203 = vmatpush1.bf16.msra.mxu0 %v155
    %204 = vmatprep.mubr.bf16.mxu0 %v73
    %205 = vmatmul.mubr.bf16.gmra.mrb[0].mxu0 %v72
    %v206 = vpop.f32.mrb[0].mxu0
    %v207 = vadd.f32 %v64, %v206
    %v208 = vpop.f32.mrb[0].mxu0
    %v209 = vpop.f32.mrb[0].mxu0
    %v210 = vadd.f32 %v64, %v209
    %v211 = vpop.f32.mrb[0].mxu0
    %212 = vdwg.mxu0
    %v213 = vld [vmem:[%s3] sm:$0xf]
    %v214 = vld [vmem:[%s3 + $0x4] sm:$0xf]
    %v215 = vunpack.c.l.bf16 %v213
    %v216 = vunpack.c.l.bf16 %v214
    %v217 = vadd.f32 %v207, %v215
    %v218 = vadd.f32 %v210, %v216
    %219 = vadd.xlane.f32.xlu0 %v217
    %v220 = vpop.xlane.xlu0 %219
    %221 = vadd.xlane.f32.xlu0 %v218
    %v222 = vpop.xlane.xlu0 %221
    %v223 = vrcp.pop 128.0
    %v224 = vmul.f32 %v220, %v223
    %v225 = vmul.f32 %v222, %v223
    %v226 = vsub.f32 %v217, %v224
    %v227 = vsub.f32 %v218, %v225
    %v228 = vmul.f32 %v226, %v226
    %v229 = vmul.f32 %v227, %v227
    %230 = vadd.xlane.f32.xlu0 %v228
    %v231 = vpop.xlane.xlu0 %230
    %232 = vadd.xlane.f32.xlu0 %v229
    %v233 = vpop.xlane.xlu0 %232
    %v234 = vmul.f32 %v231, %v223
    %v235 = vmul.f32 %v233, %v223
    %v236 = vadd.f32 %v234, 1e-12
    %v237 = vadd.f32 %v235, 1e-12
    %v238 = vrsqrt.pop %v236
    %v239 = vrsqrt.pop %v237
    %v240 = vmul.f32 %v226, %v238
    %v241 = vmul.f32 %v227, %v239
    %v242 = vld [vmem:[%s4] sm:$0x1]
    %v244 = vlaneseq
    %v245 = vshrl.u32 %v244, 7
    %v246 = vsub.s32 0, %v245
    %v247 = vrot.slane %v242, %v246
    %v249 = vmul.f32 %v240, %v247
    %v250 = vmul.f32 %v241, %v247
    %v251 = vld [vmem:[%s5] sm:$0x1]
    %v253 = vlaneseq
    %v254 = vshrl.u32 %v253, 7
    %v255 = vsub.s32 0, %v254
    %v256 = vrot.slane %v251, %v255
    %v258 = vadd.f32 %v249, %v256
    %v259 = vadd.f32 %v250, %v256
    %v260 = vpack.c.bf16 %v259, %v258
    %v262 = vunpack.c.l.b16 %v260
    %v263 = vunpack.c.h.b16 %v260
    %v264 = vpack.c.b16 %v262, %v262
    %v265 = vpack.c.b16 %v263, %v263
    %268 = vst [vmem:[#allocation2] sm:$0xf] %v264
    %269 = vst [vmem:[#allocation2 + $0x4] sm:$0xf] %v265
    // Predicated region
    $region26: #{_forward.19} parent=1 // pred_check
      _
    $region27: #{_forward.19} parent=1 // pred_check_branch
      %271 = sbr.rel (0) target = $region29
    $region28: #{_forward.19} parent=1 // pred_region
      %s273 = ssub.s32 128, 128
      %274 = vsyncadd [#allocation3], %s273
      %s275 = sshll.u32 [#allocation2], 4
      %s276 = int_to_ptr.vmem [resolvable:$true] %s275
      %281 = dma.vmem_to_hbm [thread:$0]  %s276, 128, %s6, [#allocation3], 64, 64, 4
    $region29: #{_forward.19} parent=1 // pred_fallthru
      _
    // Predicated region
    $region30: #{_forward.19} parent=1 // pred_check
      _
    $region31: #{_forward.19} parent=1 // pred_check_branch
      %283 = sbr.rel (0) target = $region33
    $region32: #{_forward.19} parent=1 // pred_region
      %284 = dma.done [#allocation3], 128
    $region33: #{_forward.19} parent=1 // pred_fallthru
      _
    %285 = vsyncpa [#allocation3], 1

</llo_original>
